<compile_context>
chip_gen: v7x
topology: tpu7x:2x2x1
jax: 0.10.0
libtpu: 0.0.40
codegen_flags: <defaults>
</compile_context>

<pallas_src>
import functools

import jax
import jax.numpy as jnp
from jax.experimental import pallas as pl
from jax.experimental.pallas import tpu as pltpu

_LANE = 128


def _channel_attention_kernel(x_ref, w1t_ref, w2t_ref, out_ref,
                              sum_acc, max_acc, *, hw, thw, need_mask):
    # x_ref   : (tb, C, thw)  f32 tile of the flattened feature map
    # w1t_ref : (C, Ch)       first 1x1-conv weight, pre-transposed
    # w2t_ref : (Ch, C)       second 1x1-conv weight, pre-transposed
    # out_ref : (tb, C)
    # sum_acc : (tb, C, 128)  lane-aligned running sum
    # max_acc : (tb, C, 128)  lane-aligned running max
    k = pl.program_id(1)
    nk = pl.num_programs(1)

    @pl.when(k == 0)
    def _init():
        sum_acc[...] = jnp.zeros_like(sum_acc)
        max_acc[...] = jnp.full_like(max_acc, -jnp.inf)

    x = x_ref[...]                                     # (tb, C, thw)
    tb, c, _ = x.shape
    ng = thw // _LANE
    xg = x.reshape(tb, c, ng, _LANE)                   # lanes stay minor

    if need_mask:
        # Positions past the true H*W hold undefined pad data; mask them.
        pos = (k * thw
               + jax.lax.broadcasted_iota(jnp.int32, (ng, _LANE), 0) * _LANE
               + jax.lax.broadcasted_iota(jnp.int32, (ng, _LANE), 1))
        valid = (pos < hw)[None, None, :, :]
        x_sum = jnp.where(valid, xg, 0.0)
        x_max = jnp.where(valid, xg, -jnp.inf)
    else:
        x_sum = xg
        x_max = xg

    # Lane-aligned partial reductions (VPU); defer the cross-lane collapse.
    sum_acc[...] = sum_acc[...] + jnp.sum(x_sum, axis=2)
    max_acc[...] = jnp.maximum(max_acc[...], jnp.max(x_max, axis=2))

    @pl.when(k == nk - 1)
    def _finalize():
        avg_pool = jnp.sum(sum_acc[...], axis=-1) * (1.0 / hw)   # (tb, C)
        max_pool = jnp.max(max_acc[...], axis=-1)                # (tb, C)
        # Fuse the two MLP evaluations into one pair of matmuls.
        pooled = jnp.concatenate([avg_pool, max_pool], axis=0)   # (2*tb, C)
        h = jnp.dot(pooled, w1t_ref[...],
                    preferred_element_type=jnp.float32)          # (2*tb, Ch)
        h = jnp.maximum(h, 0.0)
        logits2 = jnp.dot(h, w2t_ref[...],
                          preferred_element_type=jnp.float32)    # (2*tb, C)
        logits = logits2[:tb] + logits2[tb:]
        out_ref[...] = jax.nn.sigmoid(logits).astype(out_ref.dtype)


def channel_attention(x, w1, w2, *, per_buffer_bytes=8 * 1024 * 1024):
    """x: (B, C, H, W); w1: (C//r, C); w2: (C, C//r). Returns (B, C, 1, 1)."""
    B, C, H, W = x.shape
    HW = H * W
    Ch = w1.shape[0]
    assert w1.shape == (Ch, C) and w2.shape == (C, Ch)

    x_flat = x.reshape(B, C, HW).astype(jnp.float32)
    # Pre-transpose the 1x1-conv weights once in the wrapper (free layout
    # plumbing; avoids in-kernel XLU transposes).
    w1t = jnp.asarray(w1, jnp.float32).T               # (C, Ch)
    w2t = jnp.asarray(w2, jnp.float32).T               # (Ch, C)

    # ---- tile selection ---------------------------------------------------
    tb = B if B <= 8 else (8 if B % 8 == 0 else B)
    hw_pad = pl.cdiv(HW, _LANE) * _LANE
    thw = per_buffer_bytes // (tb * C * 4)
    thw = max(_LANE, (thw // _LANE) * _LANE)
    thw = min(thw, hw_pad)
    grid = (pl.cdiv(B, tb), pl.cdiv(HW, thw))
    need_mask = (HW % thw) != 0

    # Scoped-VMEM budget: double-buffered x tile + scratch + small operands.
    x_bytes = 2 * tb * C * thw * 4
    scratch_bytes = 2 * tb * C * _LANE * 4
    small_bytes = 2 * (2 * C * Ch * 4) + 2 * tb * C * 4
    vmem_limit = int(min(96 << 20,
                         max(x_bytes + scratch_bytes + small_bytes + (8 << 20),
                             32 << 20)))

    kernel = functools.partial(_channel_attention_kernel,
                               hw=HW, thw=thw, need_mask=need_mask)

    cost = pl.CostEstimate(
        flops=2 * B * C * HW + 8 * B * C * Ch,
        transcendentals=B * C,
        bytes_accessed=B * C * HW * 4 + 2 * C * Ch * 4 + B * C * 4,
    )

    out = pl.pallas_call(
        kernel,
        out_shape=jax.ShapeDtypeStruct((B, C), jnp.float32),
        grid_spec=pltpu.PrefetchScalarGridSpec(
            num_scalar_prefetch=0,
            grid=grid,
            in_specs=[
                pl.BlockSpec((tb, C, thw), lambda b, k: (b, 0, k)),
                pl.BlockSpec((C, Ch), lambda b, k: (0, 0)),
                pl.BlockSpec((Ch, C), lambda b, k: (0, 0)),
            ],
            out_specs=pl.BlockSpec((tb, C), lambda b, k: (b, 0)),
            scratch_shapes=[
                pltpu.VMEM((tb, C, _LANE), jnp.float32),
                pltpu.VMEM((tb, C, _LANE), jnp.float32),
            ],
        ),
        compiler_params=pltpu.CompilerParams(
            dimension_semantics=("parallel", "arbitrary"),
            vmem_limit_bytes=vmem_limit),
        cost_estimate=cost,
    )(x_flat, w1t, w2t)

    return out.reshape(B, C, 1, 1)


def _reference(x, w1, w2):
    # Pure-JAX reference of the PyTorch forward.
    avg = jnp.mean(x, axis=(2, 3))                     # (B, C)
    mx = jnp.max(x, axis=(2, 3))                       # (B, C)

    def mlp(p):
        h = jnp.maximum(p @ w1.T, 0.0)
        return h @ w2.T

    return jax.nn.sigmoid(mlp(avg) + mlp(mx)).reshape(*avg.shape, 1, 1)


if __name__ == "__main__":
    B, C, H, W = 2, 32, 16, 16
    ratio = 16
    Ch = C // ratio                                    # = 2

    key = jax.random.PRNGKey(0)
    kx, k1, k2 = jax.random.split(key, 3)

    x = jax.random.normal(kx, (B, C, H, W), dtype=jnp.float32)
    w1 = jax.random.normal(k1, (Ch, C), dtype=jnp.float32) * 0.1
    w2 = jax.random.normal(k2, (C, Ch), dtype=jnp.float32) * 0.1

    # 1) Default tiling (single reduction step, unmasked).
    out = jax.block_until_ready(channel_attention(x, w1, w2))
    ref = _reference(x, w1, w2)
    assert out.shape == (B, C, 1, 1), out.shape
    assert jnp.allclose(out, ref, atol=1e-5, rtol=1e-5), "mismatch (default)"

    # 2) Force thw=128 -> multi-step accumulation path (init/accum/finalize).
    out2 = jax.block_until_ready(
        channel_attention(x, w1, w2, per_buffer_bytes=32 * 1024))
    assert jnp.allclose(out2, ref, atol=1e-5, rtol=1e-5), "mismatch (multi-step)"

    # 3) Ragged spatial size (HW=144, thw=128) -> masked last tile + multi-step.
    x3 = jax.random.normal(kx, (B, C, 12, 12), dtype=jnp.float32)
    out3 = jax.block_until_ready(
        channel_attention(x3, w1, w2, per_buffer_bytes=32 * 1024))
    ref3 = _reference(x3, w1, w2)
    assert jnp.allclose(out3, ref3, atol=1e-5, rtol=1e-5), "mismatch (masked)"

    print("KERNEL_OK")
</pallas_src>

<mosaic_0001>
module attributes {stable_mosaic.version = 11 : i64} {
  func.func @_channel_attention_kernel(%arg0: i32, %arg1: i32, %arg2: memref<2x32x256xf32, #tpu.memory_space<vmem>>, %arg3: memref<32x2xf32, #tpu.memory_space<vmem>>, %arg4: memref<2x32xf32, #tpu.memory_space<vmem>>, %arg5: memref<2x32xf32, #tpu.memory_space<vmem>>, %arg6: memref<2x32x128xf32, #tpu.memory_space<vmem>>, %arg7: memref<2x32x128xf32, #tpu.memory_space<vmem>>) attributes {dimension_semantics = [#tpu.dimension_semantics<parallel>, #tpu.dimension_semantics<arbitrary>], iteration_bounds = array<i64: 1, 1>, scalar_prefetch = 0 : i64, scratch_operands = 2 : i64, tpu.core_type = #tpu.core_type<tc>, window_params = [{transform_indices = @transform_0, window_bounds = array<i64: 2, 32, 256>}, {pipeline_mode = #tpu.pipeline_mode<synchronous>, transform_indices = @transform_1, window_bounds = array<i64: 32, 2>}, {pipeline_mode = #tpu.pipeline_mode<synchronous>, transform_indices = @transform_2, window_bounds = array<i64: 2, 32>}, {transform_indices = @transform_3, window_bounds = array<i64: 2, 32>}]} {
    %c0_i32 = arith.constant 0 : i32
    %0 = arith.cmpi eq, %arg1, %c0_i32 : i32
    %1 = arith.extui %0 : i1 to i32
    %c0_i32_0 = arith.constant 0 : i32
    %2 = arith.cmpi ne, %1, %c0_i32_0 : i32
    scf.if %2 {
      %cst_18 = arith.constant 0.000000e+00 : f32
      %16 = vector.broadcast %cst_18 : f32 to vector<2x32x128xf32>
      %c0_19 = arith.constant 0 : index
      %c0_20 = arith.constant 0 : index
      %c0_21 = arith.constant 0 : index
      %17 = vector.load %arg6[%c0_19, %c0_20, %c0_21] : memref<2x32x128xf32, #tpu.memory_space<vmem>>, vector<2x32x128xf32>
      tpu.vector_store %arg6[%c0_19, %c0_20, %c0_21], %16 {strides = array<i32>} : memref<2x32x128xf32, #tpu.memory_space<vmem>>, vector<2x32x128xf32>,
      %cst_22 = arith.constant 0xFF800000 : f32
      %18 = vector.broadcast %cst_22 : f32 to vector<2x32x128xf32>
      %c0_23 = arith.constant 0 : index
      %c0_24 = arith.constant 0 : index
      %c0_25 = arith.constant 0 : index
      %19 = vector.load %arg7[%c0_23, %c0_24, %c0_25] : memref<2x32x128xf32, #tpu.memory_space<vmem>>, vector<2x32x128xf32>
      tpu.vector_store %arg7[%c0_23, %c0_24, %c0_25], %18 {strides = array<i32>} : memref<2x32x128xf32, #tpu.memory_space<vmem>>, vector<2x32x128xf32>,
    } else {
    }
    %c0 = arith.constant 0 : index
    %c0_1 = arith.constant 0 : index
    %c0_2 = arith.constant 0 : index
    %3 = vector.load %arg2[%c0, %c0_1, %c0_2] : memref<2x32x256xf32, #tpu.memory_space<vmem>>, vector<2x32x256xf32>
    %4 = vector.shape_cast %3 : vector<2x32x256xf32> to vector<2x32x2x128xf32>
    %c0_3 = arith.constant 0 : index
    %c0_4 = arith.constant 0 : index
    %c0_5 = arith.constant 0 : index
    %5 = vector.load %arg6[%c0_3, %c0_4, %c0_5] : memref<2x32x128xf32, #tpu.memory_space<vmem>>, vector<2x32x128xf32>
    %cst = arith.constant dense<0.000000e+00> : vector<2x32x128xf32>
    %6 = vector.multi_reduction <add>, %4, %cst [2] : vector<2x32x2x128xf32> to vector<2x32x128xf32>
    %7 = arith.addf %5, %6 : vector<2x32x128xf32>
    %c0_6 = arith.constant 0 : index
    %c0_7 = arith.constant 0 : index
    %c0_8 = arith.constant 0 : index
    %8 = vector.load %arg6[%c0_6, %c0_7, %c0_8] : memref<2x32x128xf32, #tpu.memory_space<vmem>>, vector<2x32x128xf32>
    tpu.vector_store %arg6[%c0_6, %c0_7, %c0_8], %7 {strides = array<i32>} : memref<2x32x128xf32, #tpu.memory_space<vmem>>, vector<2x32x128xf32>,
    %c0_9 = arith.constant 0 : index
    %c0_10 = arith.constant 0 : index
    %c0_11 = arith.constant 0 : index
    %9 = vector.load %arg7[%c0_9, %c0_10, %c0_11] : memref<2x32x128xf32, #tpu.memory_space<vmem>>, vector<2x32x128xf32>
    %cst_12 = arith.constant dense<0xFF800000> : vector<2x32x128xf32>
    %10 = vector.multi_reduction <maximumf>, %4, %cst_12 [2] : vector<2x32x2x128xf32> to vector<2x32x128xf32>
    %11 = arith.maximumf %9, %10 : vector<2x32x128xf32>
    %c0_13 = arith.constant 0 : index
    %c0_14 = arith.constant 0 : index
    %c0_15 = arith.constant 0 : index
    %12 = vector.load %arg7[%c0_13, %c0_14, %c0_15] : memref<2x32x128xf32, #tpu.memory_space<vmem>>, vector<2x32x128xf32>
    tpu.vector_store %arg7[%c0_13, %c0_14, %c0_15], %11 {strides = array<i32>} : memref<2x32x128xf32, #tpu.memory_space<vmem>>, vector<2x32x128xf32>,
    %c0_i32_16 = arith.constant 0 : i32
    %13 = arith.cmpi eq, %arg1, %c0_i32_16 : i32
    %14 = arith.extui %13 : i1 to i32
    %c0_i32_17 = arith.constant 0 : i32
    %15 = arith.cmpi ne, %14, %c0_i32_17 : i32
    scf.if %15 {
      %c0_18 = arith.constant 0 : index
      %c0_19 = arith.constant 0 : index
      %c0_20 = arith.constant 0 : index
      %16 = vector.load %arg6[%c0_18, %c0_19, %c0_20] : memref<2x32x128xf32, #tpu.memory_space<vmem>>, vector<2x32x128xf32>
      %cst_21 = arith.constant dense<0.000000e+00> : vector<2x32xf32>
      %17 = vector.multi_reduction <add>, %16, %cst_21 [2] : vector<2x32x128xf32> to vector<2x32xf32>
      %cst_22 = arith.constant 3.906250e-03 : f32
      %18 = vector.broadcast %cst_22 : f32 to vector<2x32xf32>
      %19 = arith.mulf %17, %18 : vector<2x32xf32>
      %c0_23 = arith.constant 0 : index
      %c0_24 = arith.constant 0 : index
      %c0_25 = arith.constant 0 : index
      %20 = vector.load %arg7[%c0_23, %c0_24, %c0_25] : memref<2x32x128xf32, #tpu.memory_space<vmem>>, vector<2x32x128xf32>
      %cst_26 = arith.constant dense<0xFF800000> : vector<2x32xf32>
      %21 = vector.multi_reduction <maximumf>, %20, %cst_26 [2] : vector<2x32x128xf32> to vector<2x32xf32>
      %22 = tpu.concatenate %19, %21 in 0 : vector<2x32xf32>, vector<2x32xf32> -> vector<4x32xf32>
      %c0_27 = arith.constant 0 : index
      %c0_28 = arith.constant 0 : index
      %23 = vector.load %arg3[%c0_27, %c0_28] : memref<32x2xf32, #tpu.memory_space<vmem>>, vector<32x2xf32>
      %cst_29 = arith.constant dense<0.000000e+00> : vector<4x2xf32>
      %24 = tpu.matmul %22, %23, %cst_29 {dimension_numbers = #tpu.dot_dimension_numbers<[1], [0], [0], [1], [0, 0, 1, 1], [], []>} : vector<4x32xf32>, vector<32x2xf32>, vector<4x2xf32> -> vector<4x2xf32>
      %cst_30 = arith.constant 0.000000e+00 : f32
      %25 = vector.broadcast %cst_30 : f32 to vector<4x2xf32>
      %26 = arith.maximumf %24, %25 : vector<4x2xf32>
      %c0_31 = arith.constant 0 : index
      %c0_32 = arith.constant 0 : index
      %27 = vector.load %arg4[%c0_31, %c0_32] : memref<2x32xf32, #tpu.memory_space<vmem>>, vector<2x32xf32>
      %cst_33 = arith.constant dense<0.000000e+00> : vector<4x32xf32>
      %28 = tpu.matmul %26, %27, %cst_33 {dimension_numbers = #tpu.dot_dimension_numbers<[1], [0], [0], [1], [0, 0, 1, 1], [], []>} : vector<4x2xf32>, vector<2x32xf32>, vector<4x32xf32> -> vector<4x32xf32>
      %29 = vector.extract_strided_slice %28 {offsets = [0, 0], sizes = [2, 32], strides = [1, 1]} : vector<4x32xf32> to vector<2x32xf32>
      %30 = vector.extract_strided_slice %28 {offsets = [2, 0], sizes = [2, 32], strides = [1, 1]} : vector<4x32xf32> to vector<2x32xf32>
      %31 = arith.addf %29, %30 : vector<2x32xf32>
      %32 = arith.negf %31 : vector<2x32xf32>
      %33 = math.exp %32 : vector<2x32xf32>
      %cst_34 = arith.constant 1.000000e+00 : f32
      %34 = vector.broadcast %cst_34 : f32 to vector<2x32xf32>
      %35 = arith.addf %34, %33 : vector<2x32xf32>
      %36 = arith.divf %34, %35 : vector<2x32xf32>
      %c0_35 = arith.constant 0 : index
      %c0_36 = arith.constant 0 : index
      %37 = vector.load %arg5[%c0_35, %c0_36] : memref<2x32xf32, #tpu.memory_space<vmem>>, vector<2x32xf32>
      tpu.vector_store %arg5[%c0_35, %c0_36], %36 {strides = array<i32>} : memref<2x32xf32, #tpu.memory_space<vmem>>, vector<2x32xf32>,
    } else {
    }
    return
  }
  func.func @transform_0(%arg0: i32, %arg1: i32) -> (i32, i32, i32) {
    %c0_i32 = arith.constant 0 : i32
    %c0_i32_0 = arith.constant 0 : i32
    return %arg0, %c0_i32, %arg1 : i32, i32, i32
  }
  func.func @transform_1(%arg0: i32, %arg1: i32) -> (i32, i32) {
    %c0_i32 = arith.constant 0 : i32
    %c0_i32_0 = arith.constant 0 : i32
    %c0_i32_1 = arith.constant 0 : i32
    return %c0_i32, %c0_i32_0 : i32, i32
  }
  func.func @transform_2(%arg0: i32, %arg1: i32) -> (i32, i32) {
    %c0_i32 = arith.constant 0 : i32
    %c0_i32_0 = arith.constant 0 : i32
    %c0_i32_1 = arith.constant 0 : i32
    return %c0_i32, %c0_i32_0 : i32, i32
  }
  func.func @transform_3(%arg0: i32, %arg1: i32) -> (i32, i32) {
    %c0_i32 = arith.constant 0 : i32
    %c0_i32_0 = arith.constant 0 : i32
    return %arg0, %c0_i32 : i32, i32
  }
}

</mosaic_0001>

<llo_original>
// kernel: tpu_custom_call.1
$region0: #{tpu_custom_call.1}
  #allocation0 [shape = 'u32[]', space=smem, size = 0x4, offset = 0x4, fixed_abs, tag = 'smem constant byte address 0x4 - core index']
  #allocation1 [shape = 'u32[144,128]{1,0:T(1,128)}', space=vmem, size = 0x12000, scoped, tag = 'internal scratch']
  #allocation2 [shape = 'f32[2,32,128]{2,1,0:T(8,128)}', space=vmem, size = 0x8000, scoped, tag = 'scratch operand']
  #allocation3 [shape = 'f32[2,32,128]{2,1,0:T(8,128)}', space=vmem, size = 0x8000, scoped, tag = 'scratch operand']
  %s0 = inlined_call_operand.hbm [shape: f32[2,32,256], index: 0, kind: input, shape index: {}]
  %s1 = inlined_call_operand.vmem [shape: f32[32,2], index: 1, kind: input, shape index: {}]
  %s2 = inlined_call_operand.vmem [shape: f32[2,32], index: 2, kind: input, shape index: {}]
  %s3 = inlined_call_operand.hbm [shape: f32[2,32], index: 3, kind: output, shape index: {}]
  %s4 = sld [smem:[#allocation0]]
  $region34: #{tpu_custom_call.1} parent=0
    _
  %s6 = ssub.s32 1, %s4
  %s7 = scalar_select 0, %s6, %s4
  $region1: #{tpu_custom_call.1} parent=0
    #allocation4 [shape = 'u8[65536]{0}', space=vmem, size = 0x10000, scoped, tag = 'input window, operand 0, single buffered']
    #allocation5 [shape = 's32[1]{0}', space=sflag, size = 0x4, scoped, tag = 'scoped memory for tpu_custom_call.1']
    #allocation6 [shape = 's32[1]{0}', space=sflag, size = 0x4, scoped, tag = 'scoped memory for tpu_custom_call.1']
    #allocation7 [shape = 'u8[1024]{0}', space=vmem, size = 0x400, scoped, tag = 'output window, operand 0, single buffered']
    %8 = vsyncpa [#allocation5], 0
    %9 = vsyncpa [#allocation6], 0
    // Predicated region
    $region2: #{tpu_custom_call.1} parent=1 // pred_check
      _
    $region3: #{tpu_custom_call.1} parent=1 // pred_check_branch
      %11 = sbr.rel (0) target = $region5
    $region4: #{tpu_custom_call.1} parent=1 // pred_region
      %s13 = ssub.s32 2048, 2048
      %14 = vsyncadd [#allocation5], %s13
      %s15 = sshll.u32 [#allocation4], 4
      %s16 = int_to_ptr.vmem [resolvable:$true] %s15
      %21 = dma.hbm_to_vmem [thread:$0]  %s0, 2048, %s16, [#allocation5], 256, 256, 16
    $region5: #{tpu_custom_call.1} parent=1 // pred_fallthru
      _
    // Predicated region
    $region6: #{tpu_custom_call.1} parent=1 // pred_check
      _
    $region7: #{tpu_custom_call.1} parent=1 // pred_check_branch
      %23 = sbr.rel (0) target = $region9
    $region8: #{tpu_custom_call.1} parent=1 // pred_region
      _
    $region9: #{tpu_custom_call.1} parent=1 // pred_fallthru
      _
    // Predicated region
    $region10: #{tpu_custom_call.1} parent=1 // pred_check
      _
    $region11: #{tpu_custom_call.1} parent=1 // pred_check_branch
      %25 = sbr.rel (0) target = $region13
    $region12: #{tpu_custom_call.1} parent=1 // pred_region
      _
    $region13: #{tpu_custom_call.1} parent=1 // pred_fallthru
      _
    // Predicated region
    $region14: #{tpu_custom_call.1} parent=1 // pred_check
      _
    $region15: #{tpu_custom_call.1} parent=1 // pred_check_branch
      %27 = sbr.rel (0) target = $region17
    $region16: #{tpu_custom_call.1} parent=1 // pred_region
      %28 = dma.done [#allocation5], 2048
    $region17: #{tpu_custom_call.1} parent=1 // pred_fallthru
      _
    %p29 = scmp.eq.s32.totalorder 0, 0
    // Predicated region
    $region18: #{tpu_custom_call.1} parent=1 // pred_check
      %p30 = pneg %p29
    $region19: #{tpu_custom_call.1} parent=1 // pred_check_branch
      %32 = sbr.rel (%p30) target = $region21
    $region20: #{tpu_custom_call.1} parent=1 // pred_region
      %33 = vst [vmem:[#allocation2] sm:$0xff] 0.0
      %34 = vst [vmem:[#allocation2 + $0x8] sm:$0xff] 0.0
      %35 = vst [vmem:[#allocation2 + $0x10] sm:$0xff] 0.0
      %36 = vst [vmem:[#allocation2 + $0x18] sm:$0xff] 0.0
      %37 = vst [vmem:[#allocation2 + $0x20] sm:$0xff] 0.0
      %38 = vst [vmem:[#allocation2 + $0x28] sm:$0xff] 0.0
      %39 = vst [vmem:[#allocation2 + $0x30] sm:$0xff] 0.0
      %40 = vst [vmem:[#allocation2 + $0x38] sm:$0xff] 0.0
      %41 = vst [vmem:[#allocation3] sm:$0xff] -inf
      %42 = vst [vmem:[#allocation3 + $0x8] sm:$0xff] -inf
      %43 = vst [vmem:[#allocation3 + $0x10] sm:$0xff] -inf
      %44 = vst [vmem:[#allocation3 + $0x18] sm:$0xff] -inf
      %45 = vst [vmem:[#allocation3 + $0x20] sm:$0xff] -inf
      %46 = vst [vmem:[#allocation3 + $0x28] sm:$0xff] -inf
      %47 = vst [vmem:[#allocation3 + $0x30] sm:$0xff] -inf
      %48 = vst [vmem:[#allocation3 + $0x38] sm:$0xff] -inf
    $region21: #{tpu_custom_call.1} parent=1 // pred_fallthru
      _
    %v49 = vld [vmem:[#allocation4] sm:$0xff]
    %v50 = vld [vmem:[#allocation4 + $0x8] sm:$0xff]
    %v51 = vld [vmem:[#allocation4 + $0x10] sm:$0xff]
    %v52 = vld [vmem:[#allocation4 + $0x18] sm:$0xff]
    %v53 = vld [vmem:[#allocation4 + $0x20] sm:$0xff]
    %v54 = vld [vmem:[#allocation4 + $0x28] sm:$0xff]
    %v55 = vld [vmem:[#allocation4 + $0x30] sm:$0xff]
    %v56 = vld [vmem:[#allocation4 + $0x38] sm:$0xff]
    %v57 = vld [vmem:[#allocation4 + $0x40] sm:$0xff]
    %v58 = vld [vmem:[#allocation4 + $0x48] sm:$0xff]
    %v59 = vld [vmem:[#allocation4 + $0x50] sm:$0xff]
    %v60 = vld [vmem:[#allocation4 + $0x58] sm:$0xff]
    %v61 = vld [vmem:[#allocation4 + $0x60] sm:$0xff]
    %v62 = vld [vmem:[#allocation4 + $0x68] sm:$0xff]
    %v63 = vld [vmem:[#allocation4 + $0x70] sm:$0xff]
    %v64 = vld [vmem:[#allocation4 + $0x78] sm:$0xff]
    %v65 = vcombine.high %v49, 0.0
    %v67 = vunpack.c.l.s4 1983009808
    %v68 = vunpack.c.0.s8 %v67
    %v69 = vlaneseq
    %v70 = vshrl.u32 %v69, 7
    %v71 = vsub.s32 %v68, %v70
    %v72 = vrot.slane %v49, %v71
    %v74 = vunpack.c.l.s4 1983009808
    %v75 = vunpack.c.0.s8 %v74
    %v76 = vlaneseq
    %v77 = vshrl.u32 %v76, 7
    %v78 = vsub.s32 %v75, %v77
    %v79 = vrot.slane %v65, %v78
    %v80 = vcombine.high %v50, 0.0
    %v82 = vunpack.c.l.s4 1983009808
    %v83 = vunpack.c.0.s8 %v82
    %v84 = vlaneseq
    %v85 = vshrl.u32 %v84, 7
    %v86 = vsub.s32 %v83, %v85
    %v87 = vrot.slane %v50, %v86
    %v89 = vunpack.c.l.s4 1983009808
    %v90 = vunpack.c.0.s8 %v89
    %v91 = vlaneseq
    %v92 = vshrl.u32 %v91, 7
    %v93 = vsub.s32 %v90, %v92
    %v94 = vrot.slane %v80, %v93
    %v95 = vcombine.low %v72, %v87
    %v96 = vcombine.high %v72, %v87
    %v98 = vunpack.c.l.s4 1934713408
    %v99 = vunpack.c.0.s8 %v98
    %v100 = vlaneseq
    %v101 = vshrl.u32 %v100, 7
    %v102 = vsub.s32 %v99, %v101
    %v103 = vrot.slane %v95, %v102
    %v105 = vunpack.c.l.s4 1934713408
    %v106 = vunpack.c.0.s8 %v105
    %v107 = vlaneseq
    %v108 = vshrl.u32 %v107, 7
    %v109 = vsub.s32 %v106, %v108
    %v110 = vrot.slane %v96, %v109
    %v111 = vcombine.low %v79, %v94
    %v112 = vcombine.high %v79, %v94
    %v114 = vunpack.c.l.s4 1934713408
    %v115 = vunpack.c.0.s8 %v114
    %v116 = vlaneseq
    %v117 = vshrl.u32 %v116, 7
    %v118 = vsub.s32 %v115, %v117
    %v119 = vrot.slane %v111, %v118
    %v121 = vunpack.c.l.s4 1934713408
    %v122 = vunpack.c.0.s8 %v121
    %v123 = vlaneseq
    %v124 = vshrl.u32 %v123, 7
    %v125 = vsub.s32 %v122, %v124
    %v126 = vrot.slane %v112, %v125
    %v127 = vcombine.high %v103, 0.0
    %v128 = vcombine.high %v110, 0.0
    %v129 = vcombine.high %v119, 0.0
    %v130 = vcombine.high %v126, 0.0
    %v131 = vcombine.high %v51, 0.0
    %v133 = vunpack.c.l.s4 1983009808
    %v134 = vunpack.c.0.s8 %v133
    %v135 = vlaneseq
    %v136 = vshrl.u32 %v135, 7
    %v137 = vsub.s32 %v134, %v136
    %v138 = vrot.slane %v51, %v137
    %v140 = vunpack.c.l.s4 1983009808
    %v141 = vunpack.c.0.s8 %v140
    %v142 = vlaneseq
    %v143 = vshrl.u32 %v142, 7
    %v144 = vsub.s32 %v141, %v143
    %v145 = vrot.slane %v131, %v144
    %v146 = vcombine.high %v52, 0.0
    %v148 = vunpack.c.l.s4 1983009808
    %v149 = vunpack.c.0.s8 %v148
    %v150 = vlaneseq
    %v151 = vshrl.u32 %v150, 7
    %v152 = vsub.s32 %v149, %v151
    %v153 = vrot.slane %v52, %v152
    %v155 = vunpack.c.l.s4 1983009808
    %v156 = vunpack.c.0.s8 %v155
    %v157 = vlaneseq
    %v158 = vshrl.u32 %v157, 7
    %v159 = vsub.s32 %v156, %v158
    %v160 = vrot.slane %v146, %v159
    %v161 = vcombine.low %v138, %v153
    %v162 = vcombine.high %v138, %v153
    %v164 = vunpack.c.l.s4 1934713408
    %v165 = vunpack.c.0.s8 %v164
    %v166 = vlaneseq
    %v167 = vshrl.u32 %v166, 7
    %v168 = vsub.s32 %v165, %v167
    %v169 = vrot.slane %v161, %v168
    %v171 = vunpack.c.l.s4 1934713408
    %v172 = vunpack.c.0.s8 %v171
    %v173 = vlaneseq
    %v174 = vshrl.u32 %v173, 7
    %v175 = vsub.s32 %v172, %v174
    %v176 = vrot.slane %v162, %v175
    %v177 = vcombine.low %v145, %v160
    %v178 = vcombine.high %v145, %v160
    %v180 = vunpack.c.l.s4 1934713408
    %v181 = vunpack.c.0.s8 %v180
    %v182 = vlaneseq
    %v183 = vshrl.u32 %v182, 7
    %v184 = vsub.s32 %v181, %v183
    %v185 = vrot.slane %v177, %v184
    %v187 = vunpack.c.l.s4 1934713408
    %v188 = vunpack.c.0.s8 %v187
    %v189 = vlaneseq
    %v190 = vshrl.u32 %v189, 7
    %v191 = vsub.s32 %v188, %v190
    %v192 = vrot.slane %v178, %v191
    %v193 = vcombine.high %v169, 0.0
    %v194 = vcombine.high %v176, 0.0
    %v195 = vcombine.high %v185, 0.0
    %v196 = vcombine.high %v192, 0.0
    %v197 = vcombine.high %v53, 0.0
    %v199 = vunpack.c.l.s4 1983009808
    %v200 = vunpack.c.0.s8 %v199
    %v201 = vlaneseq
    %v202 = vshrl.u32 %v201, 7
    %v203 = vsub.s32 %v200, %v202
    %v204 = vrot.slane %v53, %v203
    %v206 = vunpack.c.l.s4 1983009808
    %v207 = vunpack.c.0.s8 %v206
    %v208 = vlaneseq
    %v209 = vshrl.u32 %v208, 7
    %v210 = vsub.s32 %v207, %v209
    %v211 = vrot.slane %v197, %v210
    %v212 = vcombine.high %v54, 0.0
    %v214 = vunpack.c.l.s4 1983009808
    %v215 = vunpack.c.0.s8 %v214
    %v216 = vlaneseq
    %v217 = vshrl.u32 %v216, 7
    %v218 = vsub.s32 %v215, %v217
    %v219 = vrot.slane %v54, %v218
    %v221 = vunpack.c.l.s4 1983009808
    %v222 = vunpack.c.0.s8 %v221
    %v223 = vlaneseq
    %v224 = vshrl.u32 %v223, 7
    %v225 = vsub.s32 %v222, %v224
    %v226 = vrot.slane %v212, %v225
    %v227 = vcombine.low %v204, %v219
    %v228 = vcombine.high %v204, %v219
    %v230 = vunpack.c.l.s4 1934713408
    %v231 = vunpack.c.0.s8 %v230
    %v232 = vlaneseq
    %v233 = vshrl.u32 %v232, 7
    %v234 = vsub.s32 %v231, %v233
    %v235 = vrot.slane %v227, %v234
    %v237 = vunpack.c.l.s4 1934713408
    %v238 = vunpack.c.0.s8 %v237
    %v239 = vlaneseq
    %v240 = vshrl.u32 %v239, 7
    %v241 = vsub.s32 %v238, %v240
    %v242 = vrot.slane %v228, %v241
    %v243 = vcombine.low %v211, %v226
    %v244 = vcombine.high %v211, %v226
    %v246 = vunpack.c.l.s4 1934713408
    %v247 = vunpack.c.0.s8 %v246
    %v248 = vlaneseq
    %v249 = vshrl.u32 %v248, 7
    %v250 = vsub.s32 %v247, %v249
    %v251 = vrot.slane %v243, %v250
    %v253 = vunpack.c.l.s4 1934713408
    %v254 = vunpack.c.0.s8 %v253
    %v255 = vlaneseq
    %v256 = vshrl.u32 %v255, 7
    %v257 = vsub.s32 %v254, %v256
    %v258 = vrot.slane %v244, %v257
    %v259 = vcombine.high %v235, 0.0
    %v260 = vcombine.high %v242, 0.0
    %v261 = vcombine.high %v251, 0.0
    %v262 = vcombine.high %v258, 0.0
    %v263 = vcombine.high %v55, 0.0
    %v265 = vunpack.c.l.s4 1983009808
    %v266 = vunpack.c.0.s8 %v265
    %v267 = vlaneseq
    %v268 = vshrl.u32 %v267, 7
    %v269 = vsub.s32 %v266, %v268
    %v270 = vrot.slane %v55, %v269
    %v272 = vunpack.c.l.s4 1983009808
    %v273 = vunpack.c.0.s8 %v272
    %v274 = vlaneseq
    %v275 = vshrl.u32 %v274, 7
    %v276 = vsub.s32 %v273, %v275
    %v277 = vrot.slane %v263, %v276
    %v278 = vcombine.high %v56, 0.0
    %v280 = vunpack.c.l.s4 1983009808
    %v281 = vunpack.c.0.s8 %v280
    %v282 = vlaneseq
    %v283 = vshrl.u32 %v282, 7
    %v284 = vsub.s32 %v281, %v283
    %v285 = vrot.slane %v56, %v284
    %v287 = vunpack.c.l.s4 1983009808
    %v288 = vunpack.c.0.s8 %v287
    %v289 = vlaneseq
    %v290 = vshrl.u32 %v289, 7
    %v291 = vsub.s32 %v288, %v290
    %v292 = vrot.slane %v278, %v291
    %v293 = vcombine.low %v270, %v285
    %v294 = vcombine.high %v270, %v285
    %v296 = vunpack.c.l.s4 1934713408
    %v297 = vunpack.c.0.s8 %v296
    %v298 = vlaneseq
    %v299 = vshrl.u32 %v298, 7
    %v300 = vsub.s32 %v297, %v299
    %v301 = vrot.slane %v293, %v300
    %v303 = vunpack.c.l.s4 1934713408
    %v304 = vunpack.c.0.s8 %v303
    %v305 = vlaneseq
    %v306 = vshrl.u32 %v305, 7
    %v307 = vsub.s32 %v304, %v306
    %v308 = vrot.slane %v294, %v307
    %v309 = vcombine.low %v277, %v292
    %v310 = vcombine.high %v277, %v292
    %v312 = vunpack.c.l.s4 1934713408
    %v313 = vunpack.c.0.s8 %v312
    %v314 = vlaneseq
    %v315 = vshrl.u32 %v314, 7
    %v316 = vsub.s32 %v313, %v315
    %v317 = vrot.slane %v309, %v316
    %v319 = vunpack.c.l.s4 1934713408
    %v320 = vunpack.c.0.s8 %v319
    %v321 = vlaneseq
    %v322 = vshrl.u32 %v321, 7
    %v323 = vsub.s32 %v320, %v322
    %v324 = vrot.slane %v310, %v323
    %v325 = vcombine.high %v301, 0.0
    %v326 = vcombine.high %v308, 0.0
    %v327 = vcombine.high %v317, 0.0
    %v328 = vcombine.high %v324, 0.0
    %v329 = vcombine.high %v57, 0.0
    %v331 = vunpack.c.l.s4 1983009808
    %v332 = vunpack.c.0.s8 %v331
    %v333 = vlaneseq
    %v334 = vshrl.u32 %v333, 7
    %v335 = vsub.s32 %v332, %v334
    %v336 = vrot.slane %v57, %v335
    %v338 = vunpack.c.l.s4 1983009808
    %v339 = vunpack.c.0.s8 %v338
    %v340 = vlaneseq
    %v341 = vshrl.u32 %v340, 7
    %v342 = vsub.s32 %v339, %v341
    %v343 = vrot.slane %v329, %v342
    %v344 = vcombine.high %v58, 0.0
    %v346 = vunpack.c.l.s4 1983009808
    %v347 = vunpack.c.0.s8 %v346
    %v348 = vlaneseq
    %v349 = vshrl.u32 %v348, 7
    %v350 = vsub.s32 %v347, %v349
    %v351 = vrot.slane %v58, %v350
    %v353 = vunpack.c.l.s4 1983009808
    %v354 = vunpack.c.0.s8 %v353
    %v355 = vlaneseq
    %v356 = vshrl.u32 %v355, 7
    %v357 = vsub.s32 %v354, %v356
    %v358 = vrot.slane %v344, %v357
    %v359 = vcombine.low %v336, %v351
    %v360 = vcombine.high %v336, %v351
    %v362 = vunpack.c.l.s4 1934713408
    %v363 = vunpack.c.0.s8 %v362
    %v364 = vlaneseq
    %v365 = vshrl.u32 %v364, 7
    %v366 = vsub.s32 %v363, %v365
    %v367 = vrot.slane %v359, %v366
    %v369 = vunpack.c.l.s4 1934713408
    %v370 = vunpack.c.0.s8 %v369
    %v371 = vlaneseq
    %v372 = vshrl.u32 %v371, 7
    %v373 = vsub.s32 %v370, %v372
    %v374 = vrot.slane %v360, %v373
    %v375 = vcombine.low %v343, %v358
    %v376 = vcombine.high %v343, %v358
    %v378 = vunpack.c.l.s4 1934713408
    %v379 = vunpack.c.0.s8 %v378
    %v380 = vlaneseq
    %v381 = vshrl.u32 %v380, 7
    %v382 = vsub.s32 %v379, %v381
    %v383 = vrot.slane %v375, %v382
    %v385 = vunpack.c.l.s4 1934713408
    %v386 = vunpack.c.0.s8 %v385
    %v387 = vlaneseq
    %v388 = vshrl.u32 %v387, 7
    %v389 = vsub.s32 %v386, %v388
    %v390 = vrot.slane %v376, %v389
    %v391 = vcombine.high %v367, 0.0
    %v392 = vcombine.high %v374, 0.0
    %v393 = vcombine.high %v383, 0.0
    %v394 = vcombine.high %v390, 0.0
    %v395 = vcombine.high %v59, 0.0
    %v397 = vunpack.c.l.s4 1983009808
    %v398 = vunpack.c.0.s8 %v397
    %v399 = vlaneseq
    %v400 = vshrl.u32 %v399, 7
    %v401 = vsub.s32 %v398, %v400
    %v402 = vrot.slane %v59, %v401
    %v404 = vunpack.c.l.s4 1983009808
    %v405 = vunpack.c.0.s8 %v404
    %v406 = vlaneseq
    %v407 = vshrl.u32 %v406, 7
    %v408 = vsub.s32 %v405, %v407
    %v409 = vrot.slane %v395, %v408
    %v410 = vcombine.high %v60, 0.0
    %v412 = vunpack.c.l.s4 1983009808
    %v413 = vunpack.c.0.s8 %v412
    %v414 = vlaneseq
    %v415 = vshrl.u32 %v414, 7
    %v416 = vsub.s32 %v413, %v415
    %v417 = vrot.slane %v60, %v416
    %v419 = vunpack.c.l.s4 1983009808
    %v420 = vunpack.c.0.s8 %v419
    %v421 = vlaneseq
    %v422 = vshrl.u32 %v421, 7
    %v423 = vsub.s32 %v420, %v422
    %v424 = vrot.slane %v410, %v423
    %v425 = vcombine.low %v402, %v417
    %v426 = vcombine.high %v402, %v417
    %v428 = vunpack.c.l.s4 1934713408
    %v429 = vunpack.c.0.s8 %v428
    %v430 = vlaneseq
    %v431 = vshrl.u32 %v430, 7
    %v432 = vsub.s32 %v429, %v431
    %v433 = vrot.slane %v425, %v432
    %v435 = vunpack.c.l.s4 1934713408
    %v436 = vunpack.c.0.s8 %v435
    %v437 = vlaneseq
    %v438 = vshrl.u32 %v437, 7
    %v439 = vsub.s32 %v436, %v438
    %v440 = vrot.slane %v426, %v439
    %v441 = vcombine.low %v409, %v424
    %v442 = vcombine.high %v409, %v424
    %v444 = vunpack.c.l.s4 1934713408
    %v445 = vunpack.c.0.s8 %v444
    %v446 = vlaneseq
    %v447 = vshrl.u32 %v446, 7
    %v448 = vsub.s32 %v445, %v447
    %v449 = vrot.slane %v441, %v448
    %v451 = vunpack.c.l.s4 1934713408
    %v452 = vunpack.c.0.s8 %v451
    %v453 = vlaneseq
    %v454 = vshrl.u32 %v453, 7
    %v455 = vsub.s32 %v452, %v454
    %v456 = vrot.slane %v442, %v455
    %v457 = vcombine.high %v433, 0.0
    %v458 = vcombine.high %v440, 0.0
    %v459 = vcombine.high %v449, 0.0
    %v460 = vcombine.high %v456, 0.0
    %v461 = vcombine.high %v61, 0.0
    %v463 = vunpack.c.l.s4 1983009808
    %v464 = vunpack.c.0.s8 %v463
    %v465 = vlaneseq
    %v466 = vshrl.u32 %v465, 7
    %v467 = vsub.s32 %v464, %v466
    %v468 = vrot.slane %v61, %v467
    %v470 = vunpack.c.l.s4 1983009808
    %v471 = vunpack.c.0.s8 %v470
    %v472 = vlaneseq
    %v473 = vshrl.u32 %v472, 7
    %v474 = vsub.s32 %v471, %v473
    %v475 = vrot.slane %v461, %v474
    %v476 = vcombine.high %v62, 0.0
    %v478 = vunpack.c.l.s4 1983009808
    %v479 = vunpack.c.0.s8 %v478
    %v480 = vlaneseq
    %v481 = vshrl.u32 %v480, 7
    %v482 = vsub.s32 %v479, %v481
    %v483 = vrot.slane %v62, %v482
    %v485 = vunpack.c.l.s4 1983009808
    %v486 = vunpack.c.0.s8 %v485
    %v487 = vlaneseq
    %v488 = vshrl.u32 %v487, 7
    %v489 = vsub.s32 %v486, %v488
    %v490 = vrot.slane %v476, %v489
    %v491 = vcombine.low %v468, %v483
    %v492 = vcombine.high %v468, %v483
    %v494 = vunpack.c.l.s4 1934713408
    %v495 = vunpack.c.0.s8 %v494
    %v496 = vlaneseq
    %v497 = vshrl.u32 %v496, 7
    %v498 = vsub.s32 %v495, %v497
    %v499 = vrot.slane %v491, %v498
    %v501 = vunpack.c.l.s4 1934713408
    %v502 = vunpack.c.0.s8 %v501
    %v503 = vlaneseq
    %v504 = vshrl.u32 %v503, 7
    %v505 = vsub.s32 %v502, %v504
    %v506 = vrot.slane %v492, %v505
    %v507 = vcombine.low %v475, %v490
    %v508 = vcombine.high %v475, %v490
    %v510 = vunpack.c.l.s4 1934713408
    %v511 = vunpack.c.0.s8 %v510
    %v512 = vlaneseq
    %v513 = vshrl.u32 %v512, 7
    %v514 = vsub.s32 %v511, %v513
    %v515 = vrot.slane %v507, %v514
    %v517 = vunpack.c.l.s4 1934713408
    %v518 = vunpack.c.0.s8 %v517
    %v519 = vlaneseq
    %v520 = vshrl.u32 %v519, 7
    %v521 = vsub.s32 %v518, %v520
    %v522 = vrot.slane %v508, %v521
    %v523 = vcombine.high %v499, 0.0
    %v524 = vcombine.high %v506, 0.0
    %v525 = vcombine.high %v515, 0.0
    %v526 = vcombine.high %v522, 0.0
    %v527 = vcombine.high %v63, 0.0
    %v529 = vunpack.c.l.s4 1983009808
    %v530 = vunpack.c.0.s8 %v529
    %v531 = vlaneseq
    %v532 = vshrl.u32 %v531, 7
    %v533 = vsub.s32 %v530, %v532
    %v534 = vrot.slane %v63, %v533
    %v536 = vunpack.c.l.s4 1983009808
    %v537 = vunpack.c.0.s8 %v536
    %v538 = vlaneseq
    %v539 = vshrl.u32 %v538, 7
    %v540 = vsub.s32 %v537, %v539
    %v541 = vrot.slane %v527, %v540
    %v542 = vcombine.high %v64, 0.0
    %v544 = vunpack.c.l.s4 1983009808
    %v545 = vunpack.c.0.s8 %v544
    %v546 = vlaneseq
    %v547 = vshrl.u32 %v546, 7
    %v548 = vsub.s32 %v545, %v547
    %v549 = vrot.slane %v64, %v548
    %v551 = vunpack.c.l.s4 1983009808
    %v552 = vunpack.c.0.s8 %v551
    %v553 = vlaneseq
    %v554 = vshrl.u32 %v553, 7
    %v555 = vsub.s32 %v552, %v554
    %v556 = vrot.slane %v542, %v555
    %v557 = vcombine.low %v534, %v549
    %v558 = vcombine.high %v534, %v549
    %v560 = vunpack.c.l.s4 1934713408
    %v561 = vunpack.c.0.s8 %v560
    %v562 = vlaneseq
    %v563 = vshrl.u32 %v562, 7
    %v564 = vsub.s32 %v561, %v563
    %v565 = vrot.slane %v557, %v564
    %v567 = vunpack.c.l.s4 1934713408
    %v568 = vunpack.c.0.s8 %v567
    %v569 = vlaneseq
    %v570 = vshrl.u32 %v569, 7
    %v571 = vsub.s32 %v568, %v570
    %v572 = vrot.slane %v558, %v571
    %v573 = vcombine.low %v541, %v556
    %v574 = vcombine.high %v541, %v556
    %v576 = vunpack.c.l.s4 1934713408
    %v577 = vunpack.c.0.s8 %v576
    %v578 = vlaneseq
    %v579 = vshrl.u32 %v578, 7
    %v580 = vsub.s32 %v577, %v579
    %v581 = vrot.slane %v573, %v580
    %v583 = vunpack.c.l.s4 1934713408
    %v584 = vunpack.c.0.s8 %v583
    %v585 = vlaneseq
    %v586 = vshrl.u32 %v585, 7
    %v587 = vsub.s32 %v584, %v586
    %v588 = vrot.slane %v574, %v587
    %v589 = vcombine.high %v565, 0.0
    %v590 = vcombine.high %v572, 0.0
    %v591 = vcombine.high %v581, 0.0
    %v592 = vcombine.high %v588, 0.0
    %v593 = vld [vmem:[#allocation2] sm:$0xff]
    %v594 = vld [vmem:[#allocation2 + $0x8] sm:$0xff]
    %v595 = vld [vmem:[#allocation2 + $0x10] sm:$0xff]
    %v596 = vld [vmem:[#allocation2 + $0x18] sm:$0xff]
    %v597 = vld [vmem:[#allocation2 + $0x20] sm:$0xff]
    %v598 = vld [vmem:[#allocation2 + $0x28] sm:$0xff]
    %v599 = vld [vmem:[#allocation2 + $0x30] sm:$0xff]
    %v600 = vld [vmem:[#allocation2 + $0x38] sm:$0xff]
    %vm601 = vcmask 1041408
    %v602 = vsel %vm601, %v103, 0.0
    %v603 = vrot.slane %v602, 4
    %v604 = vadd.f32 %v602, %v603
    %v605 = vrot.slane %v604, 2
    %v606 = vadd.f32 %v604, %v605
    %v607 = vrot.slane %v606, 1
    %v608 = vadd.f32 %v606, %v607
    %v609 = vsel %vm601, %v127, 0.0
    %v610 = vrot.slane %v609, 4
    %v611 = vadd.f32 %v609, %v610
    %v612 = vrot.slane %v611, 2
    %v613 = vadd.f32 %v611, %v612
    %v614 = vrot.slane %v613, 1
    %v615 = vadd.f32 %v613, %v614
    %v616 = vsel %vm601, %v110, 0.0
    %v617 = vrot.slane %v616, 4
    %v618 = vadd.f32 %v616, %v617
    %v619 = vrot.slane %v618, 2
    %v620 = vadd.f32 %v618, %v619
    %v621 = vrot.slane %v620, 1
    %v622 = vadd.f32 %v620, %v621
    %v623 = vsel %vm601, %v128, 0.0
    %v624 = vrot.slane %v623, 4
    %v625 = vadd.f32 %v623, %v624
    %v626 = vrot.slane %v625, 2
    %v627 = vadd.f32 %v625, %v626
    %v628 = vrot.slane %v627, 1
    %v629 = vadd.f32 %v627, %v628
    %v630 = vsel %vm601, %v119, 0.0
    %v631 = vrot.slane %v630, 4
    %v632 = vadd.f32 %v630, %v631
    %v633 = vrot.slane %v632, 2
    %v634 = vadd.f32 %v632, %v633
    %v635 = vrot.slane %v634, 1
    %v636 = vadd.f32 %v634, %v635
    %v637 = vsel %vm601, %v129, 0.0
    %v638 = vrot.slane %v637, 4
    %v639 = vadd.f32 %v637, %v638
    %v640 = vrot.slane %v639, 2
    %v641 = vadd.f32 %v639, %v640
    %v642 = vrot.slane %v641, 1
    %v643 = vadd.f32 %v641, %v642
    %v644 = vsel %vm601, %v126, 0.0
    %v645 = vrot.slane %v644, 4
    %v646 = vadd.f32 %v644, %v645
    %v647 = vrot.slane %v646, 2
    %v648 = vadd.f32 %v646, %v647
    %v649 = vrot.slane %v648, 1
    %v650 = vadd.f32 %v648, %v649
    %v651 = vsel %vm601, %v130, 0.0
    %v652 = vrot.slane %v651, 4
    %v653 = vadd.f32 %v651, %v652
    %v654 = vrot.slane %v653, 2
    %v655 = vadd.f32 %v653, %v654
    %v656 = vrot.slane %v655, 1
    %v657 = vadd.f32 %v655, %v656
    %v658 = vsel %vm601, %v169, 0.0
    %v659 = vrot.slane %v658, 4
    %v660 = vadd.f32 %v658, %v659
    %v661 = vrot.slane %v660, 2
    %v662 = vadd.f32 %v660, %v661
    %v663 = vrot.slane %v662, 1
    %v664 = vadd.f32 %v662, %v663
    %v665 = vsel %vm601, %v193, 0.0
    %v666 = vrot.slane %v665, 4
    %v667 = vadd.f32 %v665, %v666
    %v668 = vrot.slane %v667, 2
    %v669 = vadd.f32 %v667, %v668
    %v670 = vrot.slane %v669, 1
    %v671 = vadd.f32 %v669, %v670
    %v672 = vsel %vm601, %v176, 0.0
    %v673 = vrot.slane %v672, 4
    %v674 = vadd.f32 %v672, %v673
    %v675 = vrot.slane %v674, 2
    %v676 = vadd.f32 %v674, %v675
    %v677 = vrot.slane %v676, 1
    %v678 = vadd.f32 %v676, %v677
    %v679 = vsel %vm601, %v194, 0.0
    %v680 = vrot.slane %v679, 4
    %v681 = vadd.f32 %v679, %v680
    %v682 = vrot.slane %v681, 2
    %v683 = vadd.f32 %v681, %v682
    %v684 = vrot.slane %v683, 1
    %v685 = vadd.f32 %v683, %v684
    %v686 = vsel %vm601, %v185, 0.0
    %v687 = vrot.slane %v686, 4
    %v688 = vadd.f32 %v686, %v687
    %v689 = vrot.slane %v688, 2
    %v690 = vadd.f32 %v688, %v689
    %v691 = vrot.slane %v690, 1
    %v692 = vadd.f32 %v690, %v691
    %v693 = vsel %vm601, %v195, 0.0
    %v694 = vrot.slane %v693, 4
    %v695 = vadd.f32 %v693, %v694
    %v696 = vrot.slane %v695, 2
    %v697 = vadd.f32 %v695, %v696
    %v698 = vrot.slane %v697, 1
    %v699 = vadd.f32 %v697, %v698
    %v700 = vsel %vm601, %v192, 0.0
    %v701 = vrot.slane %v700, 4
    %v702 = vadd.f32 %v700, %v701
    %v703 = vrot.slane %v702, 2
    %v704 = vadd.f32 %v702, %v703
    %v705 = vrot.slane %v704, 1
    %v706 = vadd.f32 %v704, %v705
    %v707 = vsel %vm601, %v196, 0.0
    %v708 = vrot.slane %v707, 4
    %v709 = vadd.f32 %v707, %v708
    %v710 = vrot.slane %v709, 2
    %v711 = vadd.f32 %v709, %v710
    %v712 = vrot.slane %v711, 1
    %v713 = vadd.f32 %v711, %v712
    %v714 = vsel %vm601, %v235, 0.0
    %v715 = vrot.slane %v714, 4
    %v716 = vadd.f32 %v714, %v715
    %v717 = vrot.slane %v716, 2
    %v718 = vadd.f32 %v716, %v717
    %v719 = vrot.slane %v718, 1
    %v720 = vadd.f32 %v718, %v719
    %v721 = vsel %vm601, %v259, 0.0
    %v722 = vrot.slane %v721, 4
    %v723 = vadd.f32 %v721, %v722
    %v724 = vrot.slane %v723, 2
    %v725 = vadd.f32 %v723, %v724
    %v726 = vrot.slane %v725, 1
    %v727 = vadd.f32 %v725, %v726
    %v728 = vsel %vm601, %v242, 0.0
    %v729 = vrot.slane %v728, 4
    %v730 = vadd.f32 %v728, %v729
    %v731 = vrot.slane %v730, 2
    %v732 = vadd.f32 %v730, %v731
    %v733 = vrot.slane %v732, 1
    %v734 = vadd.f32 %v732, %v733
    %v735 = vsel %vm601, %v260, 0.0
    %v736 = vrot.slane %v735, 4
    %v737 = vadd.f32 %v735, %v736
    %v738 = vrot.slane %v737, 2
    %v739 = vadd.f32 %v737, %v738
    %v740 = vrot.slane %v739, 1
    %v741 = vadd.f32 %v739, %v740
    %v742 = vsel %vm601, %v251, 0.0
    %v743 = vrot.slane %v742, 4
    %v744 = vadd.f32 %v742, %v743
    %v745 = vrot.slane %v744, 2
    %v746 = vadd.f32 %v744, %v745
    %v747 = vrot.slane %v746, 1
    %v748 = vadd.f32 %v746, %v747
    %v749 = vsel %vm601, %v261, 0.0
    %v750 = vrot.slane %v749, 4
    %v751 = vadd.f32 %v749, %v750
    %v752 = vrot.slane %v751, 2
    %v753 = vadd.f32 %v751, %v752
    %v754 = vrot.slane %v753, 1
    %v755 = vadd.f32 %v753, %v754
    %v756 = vsel %vm601, %v258, 0.0
    %v757 = vrot.slane %v756, 4
    %v758 = vadd.f32 %v756, %v757
    %v759 = vrot.slane %v758, 2
    %v760 = vadd.f32 %v758, %v759
    %v761 = vrot.slane %v760, 1
    %v762 = vadd.f32 %v760, %v761
    %v763 = vsel %vm601, %v262, 0.0
    %v764 = vrot.slane %v763, 4
    %v765 = vadd.f32 %v763, %v764
    %v766 = vrot.slane %v765, 2
    %v767 = vadd.f32 %v765, %v766
    %v768 = vrot.slane %v767, 1
    %v769 = vadd.f32 %v767, %v768
    %v770 = vsel %vm601, %v301, 0.0
    %v771 = vrot.slane %v770, 4
    %v772 = vadd.f32 %v770, %v771
    %v773 = vrot.slane %v772, 2
    %v774 = vadd.f32 %v772, %v773
    %v775 = vrot.slane %v774, 1
    %v776 = vadd.f32 %v774, %v775
    %v777 = vsel %vm601, %v325, 0.0
    %v778 = vrot.slane %v777, 4
    %v779 = vadd.f32 %v777, %v778
    %v780 = vrot.slane %v779, 2
    %v781 = vadd.f32 %v779, %v780
    %v782 = vrot.slane %v781, 1
    %v783 = vadd.f32 %v781, %v782
    %v784 = vsel %vm601, %v308, 0.0
    %v785 = vrot.slane %v784, 4
    %v786 = vadd.f32 %v784, %v785
    %v787 = vrot.slane %v786, 2
    %v788 = vadd.f32 %v786, %v787
    %v789 = vrot.slane %v788, 1
    %v790 = vadd.f32 %v788, %v789
    %v791 = vsel %vm601, %v326, 0.0
    %v792 = vrot.slane %v791, 4
    %v793 = vadd.f32 %v791, %v792
    %v794 = vrot.slane %v793, 2
    %v795 = vadd.f32 %v793, %v794
    %v796 = vrot.slane %v795, 1
    %v797 = vadd.f32 %v795, %v796
    %v798 = vsel %vm601, %v317, 0.0
    %v799 = vrot.slane %v798, 4
    %v800 = vadd.f32 %v798, %v799
    %v801 = vrot.slane %v800, 2
    %v802 = vadd.f32 %v800, %v801
    %v803 = vrot.slane %v802, 1
    %v804 = vadd.f32 %v802, %v803
    %v805 = vsel %vm601, %v327, 0.0
    %v806 = vrot.slane %v805, 4
    %v807 = vadd.f32 %v805, %v806
    %v808 = vrot.slane %v807, 2
    %v809 = vadd.f32 %v807, %v808
    %v810 = vrot.slane %v809, 1
    %v811 = vadd.f32 %v809, %v810
    %v812 = vsel %vm601, %v324, 0.0
    %v813 = vrot.slane %v812, 4
    %v814 = vadd.f32 %v812, %v813
    %v815 = vrot.slane %v814, 2
    %v816 = vadd.f32 %v814, %v815
    %v817 = vrot.slane %v816, 1
    %v818 = vadd.f32 %v816, %v817
    %v819 = vsel %vm601, %v328, 0.0
    %v820 = vrot.slane %v819, 4
    %v821 = vadd.f32 %v819, %v820
    %v822 = vrot.slane %v821, 2
    %v823 = vadd.f32 %v821, %v822
    %v824 = vrot.slane %v823, 1
    %v825 = vadd.f32 %v823, %v824
    %v826 = vsel %vm601, %v367, 0.0
    %v827 = vrot.slane %v826, 4
    %v828 = vadd.f32 %v826, %v827
    %v829 = vrot.slane %v828, 2
    %v830 = vadd.f32 %v828, %v829
    %v831 = vrot.slane %v830, 1
    %v832 = vadd.f32 %v830, %v831
    %v833 = vsel %vm601, %v391, 0.0
    %v834 = vrot.slane %v833, 4
    %v835 = vadd.f32 %v833, %v834
    %v836 = vrot.slane %v835, 2
    %v837 = vadd.f32 %v835, %v836
    %v838 = vrot.slane %v837, 1
    %v839 = vadd.f32 %v837, %v838
    %v840 = vsel %vm601, %v374, 0.0
    %v841 = vrot.slane %v840, 4
    %v842 = vadd.f32 %v840, %v841
    %v843 = vrot.slane %v842, 2
    %v844 = vadd.f32 %v842, %v843
    %v845 = vrot.slane %v844, 1
    %v846 = vadd.f32 %v844, %v845
    %v847 = vsel %vm601, %v392, 0.0
    %v848 = vrot.slane %v847, 4
    %v849 = vadd.f32 %v847, %v848
    %v850 = vrot.slane %v849, 2
    %v851 = vadd.f32 %v849, %v850
    %v852 = vrot.slane %v851, 1
    %v853 = vadd.f32 %v851, %v852
    %v854 = vsel %vm601, %v383, 0.0
    %v855 = vrot.slane %v854, 4
    %v856 = vadd.f32 %v854, %v855
    %v857 = vrot.slane %v856, 2
    %v858 = vadd.f32 %v856, %v857
    %v859 = vrot.slane %v858, 1
    %v860 = vadd.f32 %v858, %v859
    %v861 = vsel %vm601, %v393, 0.0
    %v862 = vrot.slane %v861, 4
    %v863 = vadd.f32 %v861, %v862
    %v864 = vrot.slane %v863, 2
    %v865 = vadd.f32 %v863, %v864
    %v866 = vrot.slane %v865, 1
    %v867 = vadd.f32 %v865, %v866
    %v868 = vsel %vm601, %v390, 0.0
    %v869 = vrot.slane %v868, 4
    %v870 = vadd.f32 %v868, %v869
    %v871 = vrot.slane %v870, 2
    %v872 = vadd.f32 %v870, %v871
    %v873 = vrot.slane %v872, 1
    %v874 = vadd.f32 %v872, %v873
    %v875 = vsel %vm601, %v394, 0.0
    %v876 = vrot.slane %v875, 4
    %v877 = vadd.f32 %v875, %v876
    %v878 = vrot.slane %v877, 2
    %v879 = vadd.f32 %v877, %v878
    %v880 = vrot.slane %v879, 1
    %v881 = vadd.f32 %v879, %v880
    %v882 = vsel %vm601, %v433, 0.0
    %v883 = vrot.slane %v882, 4
    %v884 = vadd.f32 %v882, %v883
    %v885 = vrot.slane %v884, 2
    %v886 = vadd.f32 %v884, %v885
    %v887 = vrot.slane %v886, 1
    %v888 = vadd.f32 %v886, %v887
    %v889 = vsel %vm601, %v457, 0.0
    %v890 = vrot.slane %v889, 4
    %v891 = vadd.f32 %v889, %v890
    %v892 = vrot.slane %v891, 2
    %v893 = vadd.f32 %v891, %v892
    %v894 = vrot.slane %v893, 1
    %v895 = vadd.f32 %v893, %v894
    %v896 = vsel %vm601, %v440, 0.0
    %v897 = vrot.slane %v896, 4
    %v898 = vadd.f32 %v896, %v897
    %v899 = vrot.slane %v898, 2
    %v900 = vadd.f32 %v898, %v899
    %v901 = vrot.slane %v900, 1
    %v902 = vadd.f32 %v900, %v901
    %v903 = vsel %vm601, %v458, 0.0
    %v904 = vrot.slane %v903, 4
    %v905 = vadd.f32 %v903, %v904
    %v906 = vrot.slane %v905, 2
    %v907 = vadd.f32 %v905, %v906
    %v908 = vrot.slane %v907, 1
    %v909 = vadd.f32 %v907, %v908
    %v910 = vsel %vm601, %v449, 0.0
    %v911 = vrot.slane %v910, 4
    %v912 = vadd.f32 %v910, %v911
    %v913 = vrot.slane %v912, 2
    %v914 = vadd.f32 %v912, %v913
    %v915 = vrot.slane %v914, 1
    %v916 = vadd.f32 %v914, %v915
    %v917 = vsel %vm601, %v459, 0.0
    %v918 = vrot.slane %v917, 4
    %v919 = vadd.f32 %v917, %v918
    %v920 = vrot.slane %v919, 2
    %v921 = vadd.f32 %v919, %v920
    %v922 = vrot.slane %v921, 1
    %v923 = vadd.f32 %v921, %v922
    %v924 = vsel %vm601, %v456, 0.0
    %v925 = vrot.slane %v924, 4
    %v926 = vadd.f32 %v924, %v925
    %v927 = vrot.slane %v926, 2
    %v928 = vadd.f32 %v926, %v927
    %v929 = vrot.slane %v928, 1
    %v930 = vadd.f32 %v928, %v929
    %v931 = vsel %vm601, %v460, 0.0
    %v932 = vrot.slane %v931, 4
    %v933 = vadd.f32 %v931, %v932
    %v934 = vrot.slane %v933, 2
    %v935 = vadd.f32 %v933, %v934
    %v936 = vrot.slane %v935, 1
    %v937 = vadd.f32 %v935, %v936
    %v938 = vsel %vm601, %v499, 0.0
    %v939 = vrot.slane %v938, 4
    %v940 = vadd.f32 %v938, %v939
    %v941 = vrot.slane %v940, 2
    %v942 = vadd.f32 %v940, %v941
    %v943 = vrot.slane %v942, 1
    %v944 = vadd.f32 %v942, %v943
    %v945 = vsel %vm601, %v523, 0.0
    %v946 = vrot.slane %v945, 4
    %v947 = vadd.f32 %v945, %v946
    %v948 = vrot.slane %v947, 2
    %v949 = vadd.f32 %v947, %v948
    %v950 = vrot.slane %v949, 1
    %v951 = vadd.f32 %v949, %v950
    %v952 = vsel %vm601, %v506, 0.0
    %v953 = vrot.slane %v952, 4
    %v954 = vadd.f32 %v952, %v953
    %v955 = vrot.slane %v954, 2
    %v956 = vadd.f32 %v954, %v955
    %v957 = vrot.slane %v956, 1
    %v958 = vadd.f32 %v956, %v957
    %v959 = vsel %vm601, %v524, 0.0
    %v960 = vrot.slane %v959, 4
    %v961 = vadd.f32 %v959, %v960
    %v962 = vrot.slane %v961, 2
    %v963 = vadd.f32 %v961, %v962
    %v964 = vrot.slane %v963, 1
    %v965 = vadd.f32 %v963, %v964
    %v966 = vsel %vm601, %v515, 0.0
    %v967 = vrot.slane %v966, 4
    %v968 = vadd.f32 %v966, %v967
    %v969 = vrot.slane %v968, 2
    %v970 = vadd.f32 %v968, %v969
    %v971 = vrot.slane %v970, 1
    %v972 = vadd.f32 %v970, %v971
    %v973 = vsel %vm601, %v525, 0.0
    %v974 = vrot.slane %v973, 4
    %v975 = vadd.f32 %v973, %v974
    %v976 = vrot.slane %v975, 2
    %v977 = vadd.f32 %v975, %v976
    %v978 = vrot.slane %v977, 1
    %v979 = vadd.f32 %v977, %v978
    %v980 = vsel %vm601, %v522, 0.0
    %v981 = vrot.slane %v980, 4
    %v982 = vadd.f32 %v980, %v981
    %v983 = vrot.slane %v982, 2
    %v984 = vadd.f32 %v982, %v983
    %v985 = vrot.slane %v984, 1
    %v986 = vadd.f32 %v984, %v985
    %v987 = vsel %vm601, %v526, 0.0
    %v988 = vrot.slane %v987, 4
    %v989 = vadd.f32 %v987, %v988
    %v990 = vrot.slane %v989, 2
    %v991 = vadd.f32 %v989, %v990
    %v992 = vrot.slane %v991, 1
    %v993 = vadd.f32 %v991, %v992
    %v994 = vsel %vm601, %v565, 0.0
    %v995 = vrot.slane %v994, 4
    %v996 = vadd.f32 %v994, %v995
    %v997 = vrot.slane %v996, 2
    %v998 = vadd.f32 %v996, %v997
    %v999 = vrot.slane %v998, 1
    %v1000 = vadd.f32 %v998, %v999
    %v1001 = vsel %vm601, %v589, 0.0
    %v1002 = vrot.slane %v1001, 4
    %v1003 = vadd.f32 %v1001, %v1002
    %v1004 = vrot.slane %v1003, 2
    %v1005 = vadd.f32 %v1003, %v1004
    %v1006 = vrot.slane %v1005, 1
    %v1007 = vadd.f32 %v1005, %v1006
    %v1008 = vsel %vm601, %v572, 0.0
    %v1009 = vrot.slane %v1008, 4
    %v1010 = vadd.f32 %v1008, %v1009
    %v1011 = vrot.slane %v1010, 2
    %v1012 = vadd.f32 %v1010, %v1011
    %v1013 = vrot.slane %v1012, 1
    %v1014 = vadd.f32 %v1012, %v1013
    %v1015 = vsel %vm601, %v590, 0.0
    %v1016 = vrot.slane %v1015, 4
    %v1017 = vadd.f32 %v1015, %v1016
    %v1018 = vrot.slane %v1017, 2
    %v1019 = vadd.f32 %v1017, %v1018
    %v1020 = vrot.slane %v1019, 1
    %v1021 = vadd.f32 %v1019, %v1020
    %v1022 = vsel %vm601, %v581, 0.0
    %v1023 = vrot.slane %v1022, 4
    %v1024 = vadd.f32 %v1022, %v1023
    %v1025 = vrot.slane %v1024, 2
    %v1026 = vadd.f32 %v1024, %v1025
    %v1027 = vrot.slane %v1026, 1
    %v1028 = vadd.f32 %v1026, %v1027
    %v1029 = vsel %vm601, %v591, 0.0
    %v1030 = vrot.slane %v1029, 4
    %v1031 = vadd.f32 %v1029, %v1030
    %v1032 = vrot.slane %v1031, 2
    %v1033 = vadd.f32 %v1031, %v1032
    %v1034 = vrot.slane %v1033, 1
    %v1035 = vadd.f32 %v1033, %v1034
    %v1036 = vsel %vm601, %v588, 0.0
    %v1037 = vrot.slane %v1036, 4
    %v1038 = vadd.f32 %v1036, %v1037
    %v1039 = vrot.slane %v1038, 2
    %v1040 = vadd.f32 %v1038, %v1039
    %v1041 = vrot.slane %v1040, 1
    %v1042 = vadd.f32 %v1040, %v1041
    %v1043 = vsel %vm601, %v592, 0.0
    %v1044 = vrot.slane %v1043, 4
    %v1045 = vadd.f32 %v1043, %v1044
    %v1046 = vrot.slane %v1045, 2
    %v1047 = vadd.f32 %v1045, %v1046
    %v1048 = vrot.slane %v1047, 1
    %v1049 = vadd.f32 %v1047, %v1048
    %vm1114 = vcmask 1041409
    %v1115 = vsel %vm1114, %v615, %v608
    %vm1116 = vcmask 1042434
    %v1117 = vsel %vm1116, %v622, %v1115
    %vm1118 = vcmask 1043459
    %v1119 = vsel %vm1118, %v629, %v1117
    %vm1120 = vcmask 1044484
    %v1121 = vsel %vm1120, %v636, %v1119
    %vm1122 = vcmask 1045509
    %v1123 = vsel %vm1122, %v643, %v1121
    %vm1124 = vcmask 1046534
    %v1125 = vsel %vm1124, %v650, %v1123
    %vm1126 = vcmask 1047559
    %v1127 = vsel %vm1126, %v657, %v1125
    %v1128 = vsel %vm1114, %v671, %v664
    %v1129 = vsel %vm1116, %v678, %v1128
    %v1130 = vsel %vm1118, %v685, %v1129
    %v1131 = vsel %vm1120, %v692, %v1130
    %v1132 = vsel %vm1122, %v699, %v1131
    %v1133 = vsel %vm1124, %v706, %v1132
    %v1134 = vsel %vm1126, %v713, %v1133
    %v1135 = vsel %vm1114, %v727, %v720
    %v1136 = vsel %vm1116, %v734, %v1135
    %v1137 = vsel %vm1118, %v741, %v1136
    %v1138 = vsel %vm1120, %v748, %v1137
    %v1139 = vsel %vm1122, %v755, %v1138
    %v1140 = vsel %vm1124, %v762, %v1139
    %v1141 = vsel %vm1126, %v769, %v1140
    %v1142 = vsel %vm1114, %v783, %v776
    %v1143 = vsel %vm1116, %v790, %v1142
    %v1144 = vsel %vm1118, %v797, %v1143
    %v1145 = vsel %vm1120, %v804, %v1144
    %v1146 = vsel %vm1122, %v811, %v1145
    %v1147 = vsel %vm1124, %v818, %v1146
    %v1148 = vsel %vm1126, %v825, %v1147
    %v1149 = vsel %vm1114, %v839, %v832
    %v1150 = vsel %vm1116, %v846, %v1149
    %v1151 = vsel %vm1118, %v853, %v1150
    %v1152 = vsel %vm1120, %v860, %v1151
    %v1153 = vsel %vm1122, %v867, %v1152
    %v1154 = vsel %vm1124, %v874, %v1153
    %v1155 = vsel %vm1126, %v881, %v1154
    %v1156 = vsel %vm1114, %v895, %v888
    %v1157 = vsel %vm1116, %v902, %v1156
    %v1158 = vsel %vm1118, %v909, %v1157
    %v1159 = vsel %vm1120, %v916, %v1158
    %v1160 = vsel %vm1122, %v923, %v1159
    %v1161 = vsel %vm1124, %v930, %v1160
    %v1162 = vsel %vm1126, %v937, %v1161
    %v1163 = vsel %vm1114, %v951, %v944
    %v1164 = vsel %vm1116, %v958, %v1163
    %v1165 = vsel %vm1118, %v965, %v1164
    %v1166 = vsel %vm1120, %v972, %v1165
    %v1167 = vsel %vm1122, %v979, %v1166
    %v1168 = vsel %vm1124, %v986, %v1167
    %v1169 = vsel %vm1126, %v993, %v1168
    %v1170 = vsel %vm1114, %v1007, %v1000
    %v1171 = vsel %vm1116, %v1014, %v1170
    %v1172 = vsel %vm1118, %v1021, %v1171
    %v1173 = vsel %vm1120, %v1028, %v1172
    %v1174 = vsel %vm1122, %v1035, %v1173
    %v1175 = vsel %vm1124, %v1042, %v1174
    %v1176 = vsel %vm1126, %v1049, %v1175
    %v1185 = vadd.f32 %v593, %v1127
    %v1186 = vadd.f32 %v594, %v1134
    %v1187 = vadd.f32 %v595, %v1141
    %v1188 = vadd.f32 %v596, %v1148
    %v1189 = vadd.f32 %v597, %v1155
    %v1190 = vadd.f32 %v598, %v1162
    %v1191 = vadd.f32 %v599, %v1169
    %v1192 = vadd.f32 %v600, %v1176
    %1193 = vst [vmem:[#allocation2] sm:$0xff] %v1185
    %1194 = vst [vmem:[#allocation2 + $0x8] sm:$0xff] %v1186
    %1195 = vst [vmem:[#allocation2 + $0x10] sm:$0xff] %v1187
    %1196 = vst [vmem:[#allocation2 + $0x18] sm:$0xff] %v1188
    %1197 = vst [vmem:[#allocation2 + $0x20] sm:$0xff] %v1189
    %1198 = vst [vmem:[#allocation2 + $0x28] sm:$0xff] %v1190
    %1199 = vst [vmem:[#allocation2 + $0x30] sm:$0xff] %v1191
    %1200 = vst [vmem:[#allocation2 + $0x38] sm:$0xff] %v1192
    %v1201 = vld [vmem:[#allocation3] sm:$0xff]
    %v1202 = vld [vmem:[#allocation3 + $0x8] sm:$0xff]
    %v1203 = vld [vmem:[#allocation3 + $0x10] sm:$0xff]
    %v1204 = vld [vmem:[#allocation3 + $0x18] sm:$0xff]
    %v1205 = vld [vmem:[#allocation3 + $0x20] sm:$0xff]
    %v1206 = vld [vmem:[#allocation3 + $0x28] sm:$0xff]
    %v1207 = vld [vmem:[#allocation3 + $0x30] sm:$0xff]
    %v1208 = vld [vmem:[#allocation3 + $0x38] sm:$0xff]
    %v1209 = vsel %vm601, %v103, -inf
    %v1210 = vrot.slane %v1209, 4
    %v1211 = vmax.f32 %v1209, %v1210
    %v1212 = vrot.slane %v1211, 2
    %v1213 = vmax.f32 %v1211, %v1212
    %v1214 = vrot.slane %v1213, 1
    %v1215 = vmax.f32 %v1213, %v1214
    %v1216 = vsel %vm601, %v127, -inf
    %v1217 = vrot.slane %v1216, 4
    %v1218 = vmax.f32 %v1216, %v1217
    %v1219 = vrot.slane %v1218, 2
    %v1220 = vmax.f32 %v1218, %v1219
    %v1221 = vrot.slane %v1220, 1
    %v1222 = vmax.f32 %v1220, %v1221
    %v1223 = vsel %vm601, %v110, -inf
    %v1224 = vrot.slane %v1223, 4
    %v1225 = vmax.f32 %v1223, %v1224
    %v1226 = vrot.slane %v1225, 2
    %v1227 = vmax.f32 %v1225, %v1226
    %v1228 = vrot.slane %v1227, 1
    %v1229 = vmax.f32 %v1227, %v1228
    %v1230 = vsel %vm601, %v128, -inf
    %v1231 = vrot.slane %v1230, 4
    %v1232 = vmax.f32 %v1230, %v1231
    %v1233 = vrot.slane %v1232, 2
    %v1234 = vmax.f32 %v1232, %v1233
    %v1235 = vrot.slane %v1234, 1
    %v1236 = vmax.f32 %v1234, %v1235
    %v1237 = vsel %vm601, %v119, -inf
    %v1238 = vrot.slane %v1237, 4
    %v1239 = vmax.f32 %v1237, %v1238
    %v1240 = vrot.slane %v1239, 2
    %v1241 = vmax.f32 %v1239, %v1240
    %v1242 = vrot.slane %v1241, 1
    %v1243 = vmax.f32 %v1241, %v1242
    %v1244 = vsel %vm601, %v129, -inf
    %v1245 = vrot.slane %v1244, 4
    %v1246 = vmax.f32 %v1244, %v1245
    %v1247 = vrot.slane %v1246, 2
    %v1248 = vmax.f32 %v1246, %v1247
    %v1249 = vrot.slane %v1248, 1
    %v1250 = vmax.f32 %v1248, %v1249
    %v1251 = vsel %vm601, %v126, -inf
    %v1252 = vrot.slane %v1251, 4
    %v1253 = vmax.f32 %v1251, %v1252
    %v1254 = vrot.slane %v1253, 2
    %v1255 = vmax.f32 %v1253, %v1254
    %v1256 = vrot.slane %v1255, 1
    %v1257 = vmax.f32 %v1255, %v1256
    %v1258 = vsel %vm601, %v130, -inf
    %v1259 = vrot.slane %v1258, 4
    %v1260 = vmax.f32 %v1258, %v1259
    %v1261 = vrot.slane %v1260, 2
    %v1262 = vmax.f32 %v1260, %v1261
    %v1263 = vrot.slane %v1262, 1
    %v1264 = vmax.f32 %v1262, %v1263
    %v1265 = vsel %vm601, %v169, -inf
    %v1266 = vrot.slane %v1265, 4
    %v1267 = vmax.f32 %v1265, %v1266
    %v1268 = vrot.slane %v1267, 2
    %v1269 = vmax.f32 %v1267, %v1268
    %v1270 = vrot.slane %v1269, 1
    %v1271 = vmax.f32 %v1269, %v1270
    %v1272 = vsel %vm601, %v193, -inf
    %v1273 = vrot.slane %v1272, 4
    %v1274 = vmax.f32 %v1272, %v1273
    %v1275 = vrot.slane %v1274, 2
    %v1276 = vmax.f32 %v1274, %v1275
    %v1277 = vrot.slane %v1276, 1
    %v1278 = vmax.f32 %v1276, %v1277
    %v1279 = vsel %vm601, %v176, -inf
    %v1280 = vrot.slane %v1279, 4
    %v1281 = vmax.f32 %v1279, %v1280
    %v1282 = vrot.slane %v1281, 2
    %v1283 = vmax.f32 %v1281, %v1282
    %v1284 = vrot.slane %v1283, 1
    %v1285 = vmax.f32 %v1283, %v1284
    %v1286 = vsel %vm601, %v194, -inf
    %v1287 = vrot.slane %v1286, 4
    %v1288 = vmax.f32 %v1286, %v1287
    %v1289 = vrot.slane %v1288, 2
    %v1290 = vmax.f32 %v1288, %v1289
    %v1291 = vrot.slane %v1290, 1
    %v1292 = vmax.f32 %v1290, %v1291
    %v1293 = vsel %vm601, %v185, -inf
    %v1294 = vrot.slane %v1293, 4
    %v1295 = vmax.f32 %v1293, %v1294
    %v1296 = vrot.slane %v1295, 2
    %v1297 = vmax.f32 %v1295, %v1296
    %v1298 = vrot.slane %v1297, 1
    %v1299 = vmax.f32 %v1297, %v1298
    %v1300 = vsel %vm601, %v195, -inf
    %v1301 = vrot.slane %v1300, 4
    %v1302 = vmax.f32 %v1300, %v1301
    %v1303 = vrot.slane %v1302, 2
    %v1304 = vmax.f32 %v1302, %v1303
    %v1305 = vrot.slane %v1304, 1
    %v1306 = vmax.f32 %v1304, %v1305
    %v1307 = vsel %vm601, %v192, -inf
    %v1308 = vrot.slane %v1307, 4
    %v1309 = vmax.f32 %v1307, %v1308
    %v1310 = vrot.slane %v1309, 2
    %v1311 = vmax.f32 %v1309, %v1310
    %v1312 = vrot.slane %v1311, 1
    %v1313 = vmax.f32 %v1311, %v1312
    %v1314 = vsel %vm601, %v196, -inf
    %v1315 = vrot.slane %v1314, 4
    %v1316 = vmax.f32 %v1314, %v1315
    %v1317 = vrot.slane %v1316, 2
    %v1318 = vmax.f32 %v1316, %v1317
    %v1319 = vrot.slane %v1318, 1
    %v1320 = vmax.f32 %v1318, %v1319
    %v1321 = vsel %vm601, %v235, -inf
    %v1322 = vrot.slane %v1321, 4
    %v1323 = vmax.f32 %v1321, %v1322
    %v1324 = vrot.slane %v1323, 2
    %v1325 = vmax.f32 %v1323, %v1324
    %v1326 = vrot.slane %v1325, 1
    %v1327 = vmax.f32 %v1325, %v1326
    %v1328 = vsel %vm601, %v259, -inf
    %v1329 = vrot.slane %v1328, 4
    %v1330 = vmax.f32 %v1328, %v1329
    %v1331 = vrot.slane %v1330, 2
    %v1332 = vmax.f32 %v1330, %v1331
    %v1333 = vrot.slane %v1332, 1
    %v1334 = vmax.f32 %v1332, %v1333
    %v1335 = vsel %vm601, %v242, -inf
    %v1336 = vrot.slane %v1335, 4
    %v1337 = vmax.f32 %v1335, %v1336
    %v1338 = vrot.slane %v1337, 2
    %v1339 = vmax.f32 %v1337, %v1338
    %v1340 = vrot.slane %v1339, 1
    %v1341 = vmax.f32 %v1339, %v1340
    %v1342 = vsel %vm601, %v260, -inf
    %v1343 = vrot.slane %v1342, 4
    %v1344 = vmax.f32 %v1342, %v1343
    %v1345 = vrot.slane %v1344, 2
    %v1346 = vmax.f32 %v1344, %v1345
    %v1347 = vrot.slane %v1346, 1
    %v1348 = vmax.f32 %v1346, %v1347
    %v1349 = vsel %vm601, %v251, -inf
    %v1350 = vrot.slane %v1349, 4
    %v1351 = vmax.f32 %v1349, %v1350
    %v1352 = vrot.slane %v1351, 2
    %v1353 = vmax.f32 %v1351, %v1352
    %v1354 = vrot.slane %v1353, 1
    %v1355 = vmax.f32 %v1353, %v1354
    %v1356 = vsel %vm601, %v261, -inf
    %v1357 = vrot.slane %v1356, 4
    %v1358 = vmax.f32 %v1356, %v1357
    %v1359 = vrot.slane %v1358, 2
    %v1360 = vmax.f32 %v1358, %v1359
    %v1361 = vrot.slane %v1360, 1
    %v1362 = vmax.f32 %v1360, %v1361
    %v1363 = vsel %vm601, %v258, -inf
    %v1364 = vrot.slane %v1363, 4
    %v1365 = vmax.f32 %v1363, %v1364
    %v1366 = vrot.slane %v1365, 2
    %v1367 = vmax.f32 %v1365, %v1366
    %v1368 = vrot.slane %v1367, 1
    %v1369 = vmax.f32 %v1367, %v1368
    %v1370 = vsel %vm601, %v262, -inf
    %v1371 = vrot.slane %v1370, 4
    %v1372 = vmax.f32 %v1370, %v1371
    %v1373 = vrot.slane %v1372, 2
    %v1374 = vmax.f32 %v1372, %v1373
    %v1375 = vrot.slane %v1374, 1
    %v1376 = vmax.f32 %v1374, %v1375
    %v1377 = vsel %vm601, %v301, -inf
    %v1378 = vrot.slane %v1377, 4
    %v1379 = vmax.f32 %v1377, %v1378
    %v1380 = vrot.slane %v1379, 2
    %v1381 = vmax.f32 %v1379, %v1380
    %v1382 = vrot.slane %v1381, 1
    %v1383 = vmax.f32 %v1381, %v1382
    %v1384 = vsel %vm601, %v325, -inf
    %v1385 = vrot.slane %v1384, 4
    %v1386 = vmax.f32 %v1384, %v1385
    %v1387 = vrot.slane %v1386, 2
    %v1388 = vmax.f32 %v1386, %v1387
    %v1389 = vrot.slane %v1388, 1
    %v1390 = vmax.f32 %v1388, %v1389
    %v1391 = vsel %vm601, %v308, -inf
    %v1392 = vrot.slane %v1391, 4
    %v1393 = vmax.f32 %v1391, %v1392
    %v1394 = vrot.slane %v1393, 2
    %v1395 = vmax.f32 %v1393, %v1394
    %v1396 = vrot.slane %v1395, 1
    %v1397 = vmax.f32 %v1395, %v1396
    %v1398 = vsel %vm601, %v326, -inf
    %v1399 = vrot.slane %v1398, 4
    %v1400 = vmax.f32 %v1398, %v1399
    %v1401 = vrot.slane %v1400, 2
    %v1402 = vmax.f32 %v1400, %v1401
    %v1403 = vrot.slane %v1402, 1
    %v1404 = vmax.f32 %v1402, %v1403
    %v1405 = vsel %vm601, %v317, -inf
    %v1406 = vrot.slane %v1405, 4
    %v1407 = vmax.f32 %v1405, %v1406
    %v1408 = vrot.slane %v1407, 2
    %v1409 = vmax.f32 %v1407, %v1408
    %v1410 = vrot.slane %v1409, 1
    %v1411 = vmax.f32 %v1409, %v1410
    %v1412 = vsel %vm601, %v327, -inf
    %v1413 = vrot.slane %v1412, 4
    %v1414 = vmax.f32 %v1412, %v1413
    %v1415 = vrot.slane %v1414, 2
    %v1416 = vmax.f32 %v1414, %v1415
    %v1417 = vrot.slane %v1416, 1
    %v1418 = vmax.f32 %v1416, %v1417
    %v1419 = vsel %vm601, %v324, -inf
    %v1420 = vrot.slane %v1419, 4
    %v1421 = vmax.f32 %v1419, %v1420
    %v1422 = vrot.slane %v1421, 2
    %v1423 = vmax.f32 %v1421, %v1422
    %v1424 = vrot.slane %v1423, 1
    %v1425 = vmax.f32 %v1423, %v1424
    %v1426 = vsel %vm601, %v328, -inf
    %v1427 = vrot.slane %v1426, 4
    %v1428 = vmax.f32 %v1426, %v1427
    %v1429 = vrot.slane %v1428, 2
    %v1430 = vmax.f32 %v1428, %v1429
    %v1431 = vrot.slane %v1430, 1
    %v1432 = vmax.f32 %v1430, %v1431
    %v1433 = vsel %vm601, %v367, -inf
    %v1434 = vrot.slane %v1433, 4
    %v1435 = vmax.f32 %v1433, %v1434
    %v1436 = vrot.slane %v1435, 2
    %v1437 = vmax.f32 %v1435, %v1436
    %v1438 = vrot.slane %v1437, 1
    %v1439 = vmax.f32 %v1437, %v1438
    %v1440 = vsel %vm601, %v391, -inf
    %v1441 = vrot.slane %v1440, 4
    %v1442 = vmax.f32 %v1440, %v1441
    %v1443 = vrot.slane %v1442, 2
    %v1444 = vmax.f32 %v1442, %v1443
    %v1445 = vrot.slane %v1444, 1
    %v1446 = vmax.f32 %v1444, %v1445
    %v1447 = vsel %vm601, %v374, -inf
    %v1448 = vrot.slane %v1447, 4
    %v1449 = vmax.f32 %v1447, %v1448
    %v1450 = vrot.slane %v1449, 2
    %v1451 = vmax.f32 %v1449, %v1450
    %v1452 = vrot.slane %v1451, 1
    %v1453 = vmax.f32 %v1451, %v1452
    %v1454 = vsel %vm601, %v392, -inf
    %v1455 = vrot.slane %v1454, 4
    %v1456 = vmax.f32 %v1454, %v1455
    %v1457 = vrot.slane %v1456, 2
    %v1458 = vmax.f32 %v1456, %v1457
    %v1459 = vrot.slane %v1458, 1
    %v1460 = vmax.f32 %v1458, %v1459
    %v1461 = vsel %vm601, %v383, -inf
    %v1462 = vrot.slane %v1461, 4
    %v1463 = vmax.f32 %v1461, %v1462
    %v1464 = vrot.slane %v1463, 2
    %v1465 = vmax.f32 %v1463, %v1464
    %v1466 = vrot.slane %v1465, 1
    %v1467 = vmax.f32 %v1465, %v1466
    %v1468 = vsel %vm601, %v393, -inf
    %v1469 = vrot.slane %v1468, 4
    %v1470 = vmax.f32 %v1468, %v1469
    %v1471 = vrot.slane %v1470, 2
    %v1472 = vmax.f32 %v1470, %v1471
    %v1473 = vrot.slane %v1472, 1
    %v1474 = vmax.f32 %v1472, %v1473
    %v1475 = vsel %vm601, %v390, -inf
    %v1476 = vrot.slane %v1475, 4
    %v1477 = vmax.f32 %v1475, %v1476
    %v1478 = vrot.slane %v1477, 2
    %v1479 = vmax.f32 %v1477, %v1478
    %v1480 = vrot.slane %v1479, 1
    %v1481 = vmax.f32 %v1479, %v1480
    %v1482 = vsel %vm601, %v394, -inf
    %v1483 = vrot.slane %v1482, 4
    %v1484 = vmax.f32 %v1482, %v1483
    %v1485 = vrot.slane %v1484, 2
    %v1486 = vmax.f32 %v1484, %v1485
    %v1487 = vrot.slane %v1486, 1
    %v1488 = vmax.f32 %v1486, %v1487
    %v1489 = vsel %vm601, %v433, -inf
    %v1490 = vrot.slane %v1489, 4
    %v1491 = vmax.f32 %v1489, %v1490
    %v1492 = vrot.slane %v1491, 2
    %v1493 = vmax.f32 %v1491, %v1492
    %v1494 = vrot.slane %v1493, 1
    %v1495 = vmax.f32 %v1493, %v1494
    %v1496 = vsel %vm601, %v457, -inf
    %v1497 = vrot.slane %v1496, 4
    %v1498 = vmax.f32 %v1496, %v1497
    %v1499 = vrot.slane %v1498, 2
    %v1500 = vmax.f32 %v1498, %v1499
    %v1501 = vrot.slane %v1500, 1
    %v1502 = vmax.f32 %v1500, %v1501
    %v1503 = vsel %vm601, %v440, -inf
    %v1504 = vrot.slane %v1503, 4
    %v1505 = vmax.f32 %v1503, %v1504
    %v1506 = vrot.slane %v1505, 2
    %v1507 = vmax.f32 %v1505, %v1506
    %v1508 = vrot.slane %v1507, 1
    %v1509 = vmax.f32 %v1507, %v1508
    %v1510 = vsel %vm601, %v458, -inf
    %v1511 = vrot.slane %v1510, 4
    %v1512 = vmax.f32 %v1510, %v1511
    %v1513 = vrot.slane %v1512, 2
    %v1514 = vmax.f32 %v1512, %v1513
    %v1515 = vrot.slane %v1514, 1
    %v1516 = vmax.f32 %v1514, %v1515
    %v1517 = vsel %vm601, %v449, -inf
    %v1518 = vrot.slane %v1517, 4
    %v1519 = vmax.f32 %v1517, %v1518
    %v1520 = vrot.slane %v1519, 2
    %v1521 = vmax.f32 %v1519, %v1520
    %v1522 = vrot.slane %v1521, 1
    %v1523 = vmax.f32 %v1521, %v1522
    %v1524 = vsel %vm601, %v459, -inf
    %v1525 = vrot.slane %v1524, 4
    %v1526 = vmax.f32 %v1524, %v1525
    %v1527 = vrot.slane %v1526, 2
    %v1528 = vmax.f32 %v1526, %v1527
    %v1529 = vrot.slane %v1528, 1
    %v1530 = vmax.f32 %v1528, %v1529
    %v1531 = vsel %vm601, %v456, -inf
    %v1532 = vrot.slane %v1531, 4
    %v1533 = vmax.f32 %v1531, %v1532
    %v1534 = vrot.slane %v1533, 2
    %v1535 = vmax.f32 %v1533, %v1534
    %v1536 = vrot.slane %v1535, 1
    %v1537 = vmax.f32 %v1535, %v1536
    %v1538 = vsel %vm601, %v460, -inf
    %v1539 = vrot.slane %v1538, 4
    %v1540 = vmax.f32 %v1538, %v1539
    %v1541 = vrot.slane %v1540, 2
    %v1542 = vmax.f32 %v1540, %v1541
    %v1543 = vrot.slane %v1542, 1
    %v1544 = vmax.f32 %v1542, %v1543
    %v1545 = vsel %vm601, %v499, -inf
    %v1546 = vrot.slane %v1545, 4
    %v1547 = vmax.f32 %v1545, %v1546
    %v1548 = vrot.slane %v1547, 2
    %v1549 = vmax.f32 %v1547, %v1548
    %v1550 = vrot.slane %v1549, 1
    %v1551 = vmax.f32 %v1549, %v1550
    %v1552 = vsel %vm601, %v523, -inf
    %v1553 = vrot.slane %v1552, 4
    %v1554 = vmax.f32 %v1552, %v1553
    %v1555 = vrot.slane %v1554, 2
    %v1556 = vmax.f32 %v1554, %v1555
    %v1557 = vrot.slane %v1556, 1
    %v1558 = vmax.f32 %v1556, %v1557
    %v1559 = vsel %vm601, %v506, -inf
    %v1560 = vrot.slane %v1559, 4
    %v1561 = vmax.f32 %v1559, %v1560
    %v1562 = vrot.slane %v1561, 2
    %v1563 = vmax.f32 %v1561, %v1562
    %v1564 = vrot.slane %v1563, 1
    %v1565 = vmax.f32 %v1563, %v1564
    %v1566 = vsel %vm601, %v524, -inf
    %v1567 = vrot.slane %v1566, 4
    %v1568 = vmax.f32 %v1566, %v1567
    %v1569 = vrot.slane %v1568, 2
    %v1570 = vmax.f32 %v1568, %v1569
    %v1571 = vrot.slane %v1570, 1
    %v1572 = vmax.f32 %v1570, %v1571
    %v1573 = vsel %vm601, %v515, -inf
    %v1574 = vrot.slane %v1573, 4
    %v1575 = vmax.f32 %v1573, %v1574
    %v1576 = vrot.slane %v1575, 2
    %v1577 = vmax.f32 %v1575, %v1576
    %v1578 = vrot.slane %v1577, 1
    %v1579 = vmax.f32 %v1577, %v1578
    %v1580 = vsel %vm601, %v525, -inf
    %v1581 = vrot.slane %v1580, 4
    %v1582 = vmax.f32 %v1580, %v1581
    %v1583 = vrot.slane %v1582, 2
    %v1584 = vmax.f32 %v1582, %v1583
    %v1585 = vrot.slane %v1584, 1
    %v1586 = vmax.f32 %v1584, %v1585
    %v1587 = vsel %vm601, %v522, -inf
    %v1588 = vrot.slane %v1587, 4
    %v1589 = vmax.f32 %v1587, %v1588
    %v1590 = vrot.slane %v1589, 2
    %v1591 = vmax.f32 %v1589, %v1590
    %v1592 = vrot.slane %v1591, 1
    %v1593 = vmax.f32 %v1591, %v1592
    %v1594 = vsel %vm601, %v526, -inf
    %v1595 = vrot.slane %v1594, 4
    %v1596 = vmax.f32 %v1594, %v1595
    %v1597 = vrot.slane %v1596, 2
    %v1598 = vmax.f32 %v1596, %v1597
    %v1599 = vrot.slane %v1598, 1
    %v1600 = vmax.f32 %v1598, %v1599
    %v1601 = vsel %vm601, %v565, -inf
    %v1602 = vrot.slane %v1601, 4
    %v1603 = vmax.f32 %v1601, %v1602
    %v1604 = vrot.slane %v1603, 2
    %v1605 = vmax.f32 %v1603, %v1604
    %v1606 = vrot.slane %v1605, 1
    %v1607 = vmax.f32 %v1605, %v1606
    %v1608 = vsel %vm601, %v589, -inf
    %v1609 = vrot.slane %v1608, 4
    %v1610 = vmax.f32 %v1608, %v1609
    %v1611 = vrot.slane %v1610, 2
    %v1612 = vmax.f32 %v1610, %v1611
    %v1613 = vrot.slane %v1612, 1
    %v1614 = vmax.f32 %v1612, %v1613
    %v1615 = vsel %vm601, %v572, -inf
    %v1616 = vrot.slane %v1615, 4
    %v1617 = vmax.f32 %v1615, %v1616
    %v1618 = vrot.slane %v1617, 2
    %v1619 = vmax.f32 %v1617, %v1618
    %v1620 = vrot.slane %v1619, 1
    %v1621 = vmax.f32 %v1619, %v1620
    %v1622 = vsel %vm601, %v590, -inf
    %v1623 = vrot.slane %v1622, 4
    %v1624 = vmax.f32 %v1622, %v1623
    %v1625 = vrot.slane %v1624, 2
    %v1626 = vmax.f32 %v1624, %v1625
    %v1627 = vrot.slane %v1626, 1
    %v1628 = vmax.f32 %v1626, %v1627
    %v1629 = vsel %vm601, %v581, -inf
    %v1630 = vrot.slane %v1629, 4
    %v1631 = vmax.f32 %v1629, %v1630
    %v1632 = vrot.slane %v1631, 2
    %v1633 = vmax.f32 %v1631, %v1632
    %v1634 = vrot.slane %v1633, 1
    %v1635 = vmax.f32 %v1633, %v1634
    %v1636 = vsel %vm601, %v591, -inf
    %v1637 = vrot.slane %v1636, 4
    %v1638 = vmax.f32 %v1636, %v1637
    %v1639 = vrot.slane %v1638, 2
    %v1640 = vmax.f32 %v1638, %v1639
    %v1641 = vrot.slane %v1640, 1
    %v1642 = vmax.f32 %v1640, %v1641
    %v1643 = vsel %vm601, %v588, -inf
    %v1644 = vrot.slane %v1643, 4
    %v1645 = vmax.f32 %v1643, %v1644
    %v1646 = vrot.slane %v1645, 2
    %v1647 = vmax.f32 %v1645, %v1646
    %v1648 = vrot.slane %v1647, 1
    %v1649 = vmax.f32 %v1647, %v1648
    %v1650 = vsel %vm601, %v592, -inf
    %v1651 = vrot.slane %v1650, 4
    %v1652 = vmax.f32 %v1650, %v1651
    %v1653 = vrot.slane %v1652, 2
    %v1654 = vmax.f32 %v1652, %v1653
    %v1655 = vrot.slane %v1654, 1
    %v1656 = vmax.f32 %v1654, %v1655
    %v1721 = vsel %vm1114, %v1222, %v1215
    %v1722 = vsel %vm1116, %v1229, %v1721
    %v1723 = vsel %vm1118, %v1236, %v1722
    %v1724 = vsel %vm1120, %v1243, %v1723
    %v1725 = vsel %vm1122, %v1250, %v1724
    %v1726 = vsel %vm1124, %v1257, %v1725
    %v1727 = vsel %vm1126, %v1264, %v1726
    %v1728 = vsel %vm1114, %v1278, %v1271
    %v1729 = vsel %vm1116, %v1285, %v1728
    %v1730 = vsel %vm1118, %v1292, %v1729
    %v1731 = vsel %vm1120, %v1299, %v1730
    %v1732 = vsel %vm1122, %v1306, %v1731
    %v1733 = vsel %vm1124, %v1313, %v1732
    %v1734 = vsel %vm1126, %v1320, %v1733
    %v1735 = vsel %vm1114, %v1334, %v1327
    %v1736 = vsel %vm1116, %v1341, %v1735
    %v1737 = vsel %vm1118, %v1348, %v1736
    %v1738 = vsel %vm1120, %v1355, %v1737
    %v1739 = vsel %vm1122, %v1362, %v1738
    %v1740 = vsel %vm1124, %v1369, %v1739
    %v1741 = vsel %vm1126, %v1376, %v1740
    %v1742 = vsel %vm1114, %v1390, %v1383
    %v1743 = vsel %vm1116, %v1397, %v1742
    %v1744 = vsel %vm1118, %v1404, %v1743
    %v1745 = vsel %vm1120, %v1411, %v1744
    %v1746 = vsel %vm1122, %v1418, %v1745
    %v1747 = vsel %vm1124, %v1425, %v1746
    %v1748 = vsel %vm1126, %v1432, %v1747
    %v1749 = vsel %vm1114, %v1446, %v1439
    %v1750 = vsel %vm1116, %v1453, %v1749
    %v1751 = vsel %vm1118, %v1460, %v1750
    %v1752 = vsel %vm1120, %v1467, %v1751
    %v1753 = vsel %vm1122, %v1474, %v1752
    %v1754 = vsel %vm1124, %v1481, %v1753
    %v1755 = vsel %vm1126, %v1488, %v1754
    %v1756 = vsel %vm1114, %v1502, %v1495
    %v1757 = vsel %vm1116, %v1509, %v1756
    %v1758 = vsel %vm1118, %v1516, %v1757
    %v1759 = vsel %vm1120, %v1523, %v1758
    %v1760 = vsel %vm1122, %v1530, %v1759
    %v1761 = vsel %vm1124, %v1537, %v1760
    %v1762 = vsel %vm1126, %v1544, %v1761
    %v1763 = vsel %vm1114, %v1558, %v1551
    %v1764 = vsel %vm1116, %v1565, %v1763
    %v1765 = vsel %vm1118, %v1572, %v1764
    %v1766 = vsel %vm1120, %v1579, %v1765
    %v1767 = vsel %vm1122, %v1586, %v1766
    %v1768 = vsel %vm1124, %v1593, %v1767
    %v1769 = vsel %vm1126, %v1600, %v1768
    %v1770 = vsel %vm1114, %v1614, %v1607
    %v1771 = vsel %vm1116, %v1621, %v1770
    %v1772 = vsel %vm1118, %v1628, %v1771
    %v1773 = vsel %vm1120, %v1635, %v1772
    %v1774 = vsel %vm1122, %v1642, %v1773
    %v1775 = vsel %vm1124, %v1649, %v1774
    %v1776 = vsel %vm1126, %v1656, %v1775
    %v1785 = vmax.f32 %v1201, %v1727
    %v1786 = vmax.f32 %v1202, %v1734
    %v1787 = vmax.f32 %v1203, %v1741
    %v1788 = vmax.f32 %v1204, %v1748
    %v1789 = vmax.f32 %v1205, %v1755
    %v1790 = vmax.f32 %v1206, %v1762
    %v1791 = vmax.f32 %v1207, %v1769
    %v1792 = vmax.f32 %v1208, %v1776
    %1793 = vst [vmem:[#allocation3] sm:$0xff] %v1785
    %1794 = vst [vmem:[#allocation3 + $0x8] sm:$0xff] %v1786
    %1795 = vst [vmem:[#allocation3 + $0x10] sm:$0xff] %v1787
    %1796 = vst [vmem:[#allocation3 + $0x18] sm:$0xff] %v1788
    %1797 = vst [vmem:[#allocation3 + $0x20] sm:$0xff] %v1789
    %1798 = vst [vmem:[#allocation3 + $0x28] sm:$0xff] %v1790
    %1799 = vst [vmem:[#allocation3 + $0x30] sm:$0xff] %v1791
    %1800 = vst [vmem:[#allocation3 + $0x38] sm:$0xff] %v1792
    // Predicated region
    $region22: #{tpu_custom_call.1} parent=1 // pred_check
      %p1801 = pneg %p29
    $region23: #{tpu_custom_call.1} parent=1 // pred_check_branch
      %1803 = sbr.rel (%p1801) target = $region25
    $region24: #{tpu_custom_call.1} parent=1 // pred_region
      %v1804 = vld [vmem:[#allocation2] sm:$0xff]
      %v1805 = vld [vmem:[#allocation2 + $0x8] sm:$0xff]
      %v1806 = vld [vmem:[#allocation2 + $0x10] sm:$0xff]
      %v1807 = vld [vmem:[#allocation2 + $0x18] sm:$0xff]
      %v1808 = vld [vmem:[#allocation2 + $0x20] sm:$0xff]
      %v1809 = vld [vmem:[#allocation2 + $0x28] sm:$0xff]
      %v1810 = vld [vmem:[#allocation2 + $0x30] sm:$0xff]
      %v1811 = vld [vmem:[#allocation2 + $0x38] sm:$0xff]
      %1812 = vadd.xlane.f32.xlu0 %v1804
      %v1813 = vpop.xlane.xlu0 %1812
      %1814 = vadd.xlane.f32.xlu0 %v1805
      %v1815 = vpop.xlane.xlu0 %1814
      %1816 = vadd.xlane.f32.xlu0 %v1806
      %v1817 = vpop.xlane.xlu0 %1816
      %1818 = vadd.xlane.f32.xlu0 %v1807
      %v1819 = vpop.xlane.xlu0 %1818
      %1820 = vadd.xlane.f32.xlu0 %v1808
      %v1821 = vpop.xlane.xlu0 %1820
      %1822 = vadd.xlane.f32.xlu0 %v1809
      %v1823 = vpop.xlane.xlu0 %1822
      %1824 = vadd.xlane.f32.xlu0 %v1810
      %v1825 = vpop.xlane.xlu0 %1824
      %1826 = vadd.xlane.f32.xlu0 %v1811
      %v1827 = vpop.xlane.xlu0 %1826
      %v1828 = vmul.f32 %v1813, 0.00390625
      %v1829 = vmul.f32 %v1815, 0.00390625
      %v1830 = vmul.f32 %v1817, 0.00390625
      %v1831 = vmul.f32 %v1819, 0.00390625
      %v1832 = vmul.f32 %v1821, 0.00390625
      %v1833 = vmul.f32 %v1823, 0.00390625
      %v1834 = vmul.f32 %v1825, 0.00390625
      %v1835 = vmul.f32 %v1827, 0.00390625
      %v1836 = vld [vmem:[#allocation3] sm:$0xff]
      %v1837 = vld [vmem:[#allocation3 + $0x8] sm:$0xff]
      %v1838 = vld [vmem:[#allocation3 + $0x10] sm:$0xff]
      %v1839 = vld [vmem:[#allocation3 + $0x18] sm:$0xff]
      %v1840 = vld [vmem:[#allocation3 + $0x20] sm:$0xff]
      %v1841 = vld [vmem:[#allocation3 + $0x28] sm:$0xff]
      %v1842 = vld [vmem:[#allocation3 + $0x30] sm:$0xff]
      %v1843 = vld [vmem:[#allocation3 + $0x38] sm:$0xff]
      %1844 = vmax.xlane.f32.xlu0 %v1836
      %v1845 = vpop.xlane.xlu0 %1844
      %1846 = vmax.xlane.f32.xlu0 %v1837
      %v1847 = vpop.xlane.xlu0 %1846
      %1848 = vmax.xlane.f32.xlu0 %v1838
      %v1849 = vpop.xlane.xlu0 %1848
      %1850 = vmax.xlane.f32.xlu0 %v1839
      %v1851 = vpop.xlane.xlu0 %1850
      %1852 = vmax.xlane.f32.xlu0 %v1840
      %v1853 = vpop.xlane.xlu0 %1852
      %1854 = vmax.xlane.f32.xlu0 %v1841
      %v1855 = vpop.xlane.xlu0 %1854
      %1856 = vmax.xlane.f32.xlu0 %v1842
      %v1857 = vpop.xlane.xlu0 %1856
      %1858 = vmax.xlane.f32.xlu0 %v1843
      %v1859 = vpop.xlane.xlu0 %1858
      %v1868 = vlaneseq
      %v1869 = vand.u32 %v1868, 127
      %v1870 = vlaneseq
      %v1871 = vshrl.u32 %v1870, 7
      %v1872 = vsub.s32 %v1869, %v1871
      %v1873 = vrot.slane %v1828, %v1872
      %v1874 = vadd.s32 %v1869, 4294967288
      %v1875 = vlaneseq
      %v1876 = vshrl.u32 %v1875, 7
      %v1877 = vsub.s32 %v1874, %v1876
      %v1878 = vrot.slane %v1829, %v1877
      %vm1879 = vcmask 130112
      %v1880 = vsel %vm1879, %v1878, %v1873
      %v1881 = vadd.s32 %v1869, 4294967280
      %v1882 = vlaneseq
      %v1883 = vshrl.u32 %v1882, 7
      %v1884 = vsub.s32 %v1881, %v1883
      %v1885 = vrot.slane %v1830, %v1884
      %vm1886 = vcmask 195712
      %v1887 = vsel %vm1886, %v1885, %v1880
      %v1888 = vadd.s32 %v1869, 4294967272
      %v1889 = vlaneseq
      %v1890 = vshrl.u32 %v1889, 7
      %v1891 = vsub.s32 %v1888, %v1890
      %v1892 = vrot.slane %v1831, %v1891
      %vm1893 = vcmask 261312
      %v1894 = vsel %vm1893, %v1892, %v1887
      %v1895 = vlaneseq
      %v1896 = vshrl.u32 %v1895, 7
      %v1897 = vsub.s32 %v1869, %v1896
      %v1898 = vrot.slane %v1832, %v1897
      %v1899 = vlaneseq
      %v1900 = vshrl.u32 %v1899, 7
      %v1901 = vsub.s32 %v1874, %v1900
      %v1902 = vrot.slane %v1833, %v1901
      %v1903 = vsel %vm1879, %v1902, %v1898
      %v1904 = vlaneseq
      %v1905 = vshrl.u32 %v1904, 7
      %v1906 = vsub.s32 %v1881, %v1905
      %v1907 = vrot.slane %v1834, %v1906
      %v1908 = vsel %vm1886, %v1907, %v1903
      %v1909 = vlaneseq
      %v1910 = vshrl.u32 %v1909, 7
      %v1911 = vsub.s32 %v1888, %v1910
      %v1912 = vrot.slane %v1835, %v1911
      %v1913 = vsel %vm1893, %v1912, %v1908
      %v1914 = vsel %vm1114, %v1913, %v1894
      %v1924 = vlaneseq
      %v1925 = vshrl.u32 %v1924, 7
      %v1926 = vsub.s32 %v1869, %v1925
      %v1927 = vrot.slane %v1845, %v1926
      %v1928 = vlaneseq
      %v1929 = vshrl.u32 %v1928, 7
      %v1930 = vsub.s32 %v1874, %v1929
      %v1931 = vrot.slane %v1847, %v1930
      %v1932 = vsel %vm1879, %v1931, %v1927
      %v1933 = vlaneseq
      %v1934 = vshrl.u32 %v1933, 7
      %v1935 = vsub.s32 %v1881, %v1934
      %v1936 = vrot.slane %v1849, %v1935
      %v1937 = vsel %vm1886, %v1936, %v1932
      %v1938 = vlaneseq
      %v1939 = vshrl.u32 %v1938, 7
      %v1940 = vsub.s32 %v1888, %v1939
      %v1941 = vrot.slane %v1851, %v1940
      %v1942 = vsel %vm1893, %v1941, %v1937
      %v1943 = vlaneseq
      %v1944 = vshrl.u32 %v1943, 7
      %v1945 = vsub.s32 %v1869, %v1944
      %v1946 = vrot.slane %v1853, %v1945
      %v1947 = vlaneseq
      %v1948 = vshrl.u32 %v1947, 7
      %v1949 = vsub.s32 %v1874, %v1948
      %v1950 = vrot.slane %v1855, %v1949
      %v1951 = vsel %vm1879, %v1950, %v1946
      %v1952 = vlaneseq
      %v1953 = vshrl.u32 %v1952, 7
      %v1954 = vsub.s32 %v1881, %v1953
      %v1955 = vrot.slane %v1857, %v1954
      %v1956 = vsel %vm1886, %v1955, %v1951
      %v1957 = vlaneseq
      %v1958 = vshrl.u32 %v1957, 7
      %v1959 = vsub.s32 %v1888, %v1958
      %v1960 = vrot.slane %v1859, %v1959
      %v1961 = vsel %vm1893, %v1960, %v1956
      %v1962 = vsel %vm1118, %v1961, %v1942
      %v1964 = vsel %vm601, %v1914, %v1962
      %v1965 = vld [vmem:[%s1] sm:$0xff]
      %v1966 = vld [vmem:[%s1 + $0x8] sm:$0xff]
      %v1967 = vld [vmem:[%s1 + $0x10] sm:$0xff]
      %v1968 = vld [vmem:[%s1 + $0x18] sm:$0xff]
      %vm1969 = vcmask 261120
      %v1971 = vsel %vm1969, %v1964, 0
      %1973 = vmatprep.subr.mxu0 0.0
      %1974 = vmatpush1.msra.mxu0 %v1965
      %1975 = vmatprep.subr.mxu0 0.0
      %1976 = vmatpush1.msra.mxu0 %v1966
      %1977 = vmatprep.subr.mxu0 0.0
      %1978 = vmatpush1.msra.mxu0 %v1967
      %1979 = vmatprep.subr.mxu0 0.0
      %1980 = vmatpush1.msra.mxu0 %v1968
      %1981 = vmatprep.subr.mxu0 0.0
      %1982 = vmatpush1.msra.mxu0 0.0
      %1983 = vmatprep.subr.mxu0 0.0
      %1984 = vmatpush1.msra.mxu0 0.0
      %1985 = vmatprep.subr.mxu0 0.0
      %1986 = vmatpush1.msra.mxu0 0.0
      %1987 = vmatprep.subr.mxu0 0.0
      %1988 = vmatpush1.msra.mxu0 0.0
      %1989 = vmatprep.subr.mxu0 0.0
      %1990 = vmatpush1.msra.mxu0 0.0
      %1991 = vmatprep.subr.mxu0 0.0
      %1992 = vmatpush1.msra.mxu0 0.0
      %1993 = vmatprep.subr.mxu0 0.0
      %1994 = vmatpush1.msra.mxu0 0.0
      %1995 = vmatprep.subr.mxu0 0.0
      %1996 = vmatpush1.msra.mxu0 0.0
      %1997 = vmatprep.subr.mxu0 0.0
      %1998 = vmatpush1.msra.mxu0 0.0
      %1999 = vmatprep.subr.mxu0 0.0
      %2000 = vmatpush1.msra.mxu0 0.0
      %2001 = vmatprep.subr.mxu0 0.0
      %2002 = vmatpush1.msra.mxu0 0.0
      %2003 = vmatprep.subr.mxu0 0.0
      %2004 = vmatpush1.msra.mxu0 0.0
      %2005 = vmatprep.subr.mxu0 0.0
      %2006 = vmatpush1.msra.mxu0 0.0
      %2007 = vmatprep.subr.mxu0 0.0
      %2008 = vmatpush1.msra.mxu0 0.0
      %2009 = vmatprep.subr.mxu0 0.0
      %2010 = vmatpush1.msra.mxu0 0.0
      %2011 = vmatprep.subr.mxu0 0.0
      %2012 = vmatpush1.msra.mxu0 0.0
      %2013 = vmatprep.subr.mxu0 0.0
      %2014 = vmatpush1.msra.mxu0 0.0
      %2015 = vmatprep.subr.mxu0 0.0
      %2016 = vmatpush1.msra.mxu0 0.0
      %2017 = vmatprep.subr.mxu0 0.0
      %2018 = vmatpush1.msra.mxu0 0.0
      %2019 = vmatprep.subr.mxu0 0.0
      %2020 = vmatpush1.msra.mxu0 0.0
      %2021 = vmatprep.subr.mxu0 0.0
      %2022 = vmatpush1.msra.mxu0 0.0
      %2023 = vmatprep.subr.mxu0 0.0
      %2024 = vmatpush1.msra.mxu0 0.0
      %2025 = vmatprep.subr.mxu0 0.0
      %2026 = vmatpush1.msra.mxu0 0.0
      %2027 = vmatprep.subr.mxu0 0.0
      %2028 = vmatpush1.msra.mxu0 0.0
      %2029 = vmatprep.subr.mxu0 0.0
      %2030 = vmatpush1.msra.mxu0 0.0
      %2031 = vmatprep.subr.mxu0 0.0
      %2032 = vmatpush1.msra.mxu0 0.0
      %2033 = vmatprep.subr.mxu0 0.0
      %2034 = vmatpush1.msra.mxu0 0.0
      %2035 = vmatprep.subr.mxu0 0.0
      %2036 = vmatpush1.msra.mxu0 0.0
      %2037 = vmatprep.mubr.f32.mxu0 0.0
      %2038 = vmatmul.mubr.f32.gmra.mrb[0].mxu0 %v1971
      %v2039 = vpop.f32.mrb[0].mxu0
      %v2040 = vadd.f32 0.0, %v2039
      %v2041 = vpop.f32.mrb[0].mxu0
      %2042 = vdwg.mxu0
      %v2043 = vmax.f32 %v2040, 0.0
      %v2044 = vld [vmem:[%s2] sm:$0x3]
      %vm2045 = vcmask 15360
      %v2047 = vsel %vm2045, %v2043, 0
      %v2050 = vsel %vm601, %v2044, 0
      %2052 = vmatprep.subr.mxu0 0.0
      %2053 = vmatpush1.msra.mxu0 %v2050
      %2054 = vmatprep.subr.mxu0 0.0
      %2055 = vmatpush1.msra.mxu0 0.0
      %2056 = vmatprep.subr.mxu0 0.0
      %2057 = vmatpush1.msra.mxu0 0.0
      %2058 = vmatprep.subr.mxu0 0.0
      %2059 = vmatpush1.msra.mxu0 0.0
      %2060 = vmatprep.subr.mxu0 0.0
      %2061 = vmatpush1.msra.mxu0 0.0
      %2062 = vmatprep.subr.mxu0 0.0
      %2063 = vmatpush1.msra.mxu0 0.0
      %2064 = vmatprep.subr.mxu0 0.0
      %2065 = vmatpush1.msra.mxu0 0.0
      %2066 = vmatprep.subr.mxu0 0.0
      %2067 = vmatpush1.msra.mxu0 0.0
      %2068 = vmatprep.subr.mxu0 0.0
      %2069 = vmatpush1.msra.mxu0 0.0
      %2070 = vmatprep.subr.mxu0 0.0
      %2071 = vmatpush1.msra.mxu0 0.0
      %2072 = vmatprep.subr.mxu0 0.0
      %2073 = vmatpush1.msra.mxu0 0.0
      %2074 = vmatprep.subr.mxu0 0.0
      %2075 = vmatpush1.msra.mxu0 0.0
      %2076 = vmatprep.subr.mxu0 0.0
      %2077 = vmatpush1.msra.mxu0 0.0
      %2078 = vmatprep.subr.mxu0 0.0
      %2079 = vmatpush1.msra.mxu0 0.0
      %2080 = vmatprep.subr.mxu0 0.0
      %2081 = vmatpush1.msra.mxu0 0.0
      %2082 = vmatprep.subr.mxu0 0.0
      %2083 = vmatpush1.msra.mxu0 0.0
      %2084 = vmatprep.subr.mxu0 0.0
      %2085 = vmatpush1.msra.mxu0 0.0
      %2086 = vmatprep.subr.mxu0 0.0
      %2087 = vmatpush1.msra.mxu0 0.0
      %2088 = vmatprep.subr.mxu0 0.0
      %2089 = vmatpush1.msra.mxu0 0.0
      %2090 = vmatprep.subr.mxu0 0.0
      %2091 = vmatpush1.msra.mxu0 0.0
      %2092 = vmatprep.subr.mxu0 0.0
      %2093 = vmatpush1.msra.mxu0 0.0
      %2094 = vmatprep.subr.mxu0 0.0
      %2095 = vmatpush1.msra.mxu0 0.0
      %2096 = vmatprep.subr.mxu0 0.0
      %2097 = vmatpush1.msra.mxu0 0.0
      %2098 = vmatprep.subr.mxu0 0.0
      %2099 = vmatpush1.msra.mxu0 0.0
      %2100 = vmatprep.subr.mxu0 0.0
      %2101 = vmatpush1.msra.mxu0 0.0
      %2102 = vmatprep.subr.mxu0 0.0
      %2103 = vmatpush1.msra.mxu0 0.0
      %2104 = vmatprep.subr.mxu0 0.0
      %2105 = vmatpush1.msra.mxu0 0.0
      %2106 = vmatprep.subr.mxu0 0.0
      %2107 = vmatpush1.msra.mxu0 0.0
      %2108 = vmatprep.subr.mxu0 0.0
      %2109 = vmatpush1.msra.mxu0 0.0
      %2110 = vmatprep.subr.mxu0 0.0
      %2111 = vmatpush1.msra.mxu0 0.0
      %2112 = vmatprep.subr.mxu0 0.0
      %2113 = vmatpush1.msra.mxu0 0.0
      %2114 = vmatprep.subr.mxu0 0.0
      %2115 = vmatpush1.msra.mxu0 0.0
      %2116 = vmatprep.mubr.f32.mxu0 0.0
      %2117 = vmatmul.mubr.f32.gmra.mrb[0].mxu0 %v2047
      %v2118 = vpop.f32.mrb[0].mxu0
      %v2119 = vadd.f32 0.0, %v2118
      %v2120 = vpop.f32.mrb[0].mxu0
      %2121 = vdwg.mxu0
      %v2123 = vrot.slane %v2119, 2
      %v2125 = vadd.f32 %v2119, %v2123
      %v2126 = vxor.u32 %v2125, 2147483648
      %v2127 = vmul.f32 %v2126, 1.442695
      %v2128 = vpow.pop %v2127
      %v2129 = vadd.f32 %v2128, 1.0
      %v2130 = vrcp.pop %v2129
      %v2131 = vmul.f32 1.0, %v2130
      %vm2132 = vcmask 254976
      %2133 = vst.msk [vmem:[#allocation7] sm:$0x3] %vm2132, %v2131
    $region25: #{tpu_custom_call.1} parent=1 // pred_fallthru
      _
    // Predicated region
    $region26: #{tpu_custom_call.1} parent=1 // pred_check
      _
    $region27: #{tpu_custom_call.1} parent=1 // pred_check_branch
      %2135 = sbr.rel (0) target = $region29
    $region28: #{tpu_custom_call.1} parent=1 // pred_region
      %s2137 = ssub.s32 32, 32
      %2138 = vsyncadd [#allocation6], %s2137
      %s2140 = sshll.u32 [#allocation7], 4
      %s2141 = int_to_ptr.vmem [resolvable:$true] %s2140
      %2143 = dma.vmem_to_hbm [thread:$0]  %s2141, 32, %s3, [#allocation6]
    $region29: #{tpu_custom_call.1} parent=1 // pred_fallthru
      _
    // Predicated region
    $region30: #{tpu_custom_call.1} parent=1 // pred_check
      _
    $region31: #{tpu_custom_call.1} parent=1 // pred_check_branch
      %2145 = sbr.rel (0) target = $region33
    $region32: #{tpu_custom_call.1} parent=1 // pred_region
      %2146 = dma.done [#allocation6], 32
    $region33: #{tpu_custom_call.1} parent=1 // pred_fallthru
      _
    %2147 = vsyncpa [#allocation5], 1
    %2148 = vsyncpa [#allocation6], 1

</llo_original>
